<compile_context>
chip_gen: v6e
topology: v6e:2x2x1
jax: 0.10.0
libtpu: 0.0.40
codegen_flags: <defaults>
</compile_context>

<pallas_src>
import functools

import jax
import jax.numpy as jnp
from jax.experimental import pallas as pl
from jax.experimental.pallas import tpu as pltpu


_MAX_ROW_TILE = 2048   # cap on pixel rows per grid step (multiple of 8)
_LANE = 128            # lane width: every channel dim is padded to this


def _round_up(n, m):
    return ((n + m - 1) // m) * m


def _leaky_relu(x, slope=0.01):
    return jnp.where(x > 0, x, slope * x)


def _choose_row_tile(m_rows):
    """Largest row tile (<= _MAX_ROW_TILE) that still leaves >= 2 grid steps,
    so the 'parallel' grid axis can shard across both v7x TensorCores."""
    if m_rows <= 8:
        return 8
    half = _round_up((m_rows + 1) // 2, 8)
    return max(8, min(_MAX_ROW_TILE, half))


def _convnet_kernel(col_ref, w1_ref, b1_ref, w2_ref, b2_ref, w3_ref, b3_ref,
                    w4_ref, b4_ref, out_ref):
    # col_ref: (tm, 128) bf16 im2col rows for this tile.
    # Four chained MXU matmuls: 5x5 conv (as im2col matmul) + three 1x1 convs.
    # bf16 operands, f32 accumulation; bias add + LeakyReLU stay f32.
    h = jnp.dot(col_ref[...], w1_ref[...], preferred_element_type=jnp.float32)
    h = _leaky_relu(h + b1_ref[...])
    h = jnp.dot(h.astype(jnp.bfloat16), w2_ref[...],
                preferred_element_type=jnp.float32)
    h = _leaky_relu(h + b2_ref[...])
    h = jnp.dot(h.astype(jnp.bfloat16), w3_ref[...],
                preferred_element_type=jnp.float32)
    h = _leaky_relu(h + b3_ref[...])
    h = jnp.dot(h.astype(jnp.bfloat16), w4_ref[...],
                preferred_element_type=jnp.float32)
    out_ref[...] = (h + b4_ref[...]).astype(out_ref.dtype)


def init_params(key, feature_size, embed_size, num_actions, kernel_size=5):
    """Deterministic synthetic parameters (not a checkpoint load).

    Weight layout is kernel-friendly (pre-transposed vs torch's (O,I,K,K)):
      w1: (K*K*Cin, 4*embed)   -- flat (ky, kx, cin) rows, im2col order
      w2: (4*embed, 2*embed), w3: (2*embed, embed), w4: (embed, num_actions)
      biases as (1, Cout) for in-kernel broadcasting.
    """
    k = kernel_size
    c1, c2, c3 = embed_size * 4, embed_size * 2, embed_size
    keys = jax.random.split(key, 8)
    s = 0.05
    w1 = s * jax.random.normal(keys[0], (k * k * feature_size, c1), jnp.float32)
    b1 = s * jax.random.normal(keys[1], (1, c1), jnp.float32)
    w2 = s * jax.random.normal(keys[2], (c1, c2), jnp.float32)
    b2 = s * jax.random.normal(keys[3], (1, c2), jnp.float32)
    w3 = s * jax.random.normal(keys[4], (c2, c3), jnp.float32)
    b3 = s * jax.random.normal(keys[5], (1, c3), jnp.float32)
    w4 = s * jax.random.normal(keys[6], (c3, num_actions), jnp.float32)
    b4 = s * jax.random.normal(keys[7], (1, num_actions), jnp.float32)
    return dict(w1=w1, b1=b1, w2=w2, b2=b2, w3=w3, b3=b3, w4=w4, b4=b4,
                kernel_size=k)


def _pad2(a, rows, cols):
    return jnp.pad(a, ((0, rows - a.shape[0]), (0, cols - a.shape[1])))


@functools.partial(jax.jit, static_argnames=("num_actions", "kernel_size"))
def _convnet_forward_jit(x, w1, b1, w2, b2, w3, b3, w4, b4, *,
                         num_actions, kernel_size):
    # x: (N, H, W, Cin) float32
    N, H, W, Cin = x.shape
    K = kernel_size
    pad = K // 2

    # --- wrapper-side im2col: the 5x5 "same" conv becomes one dense matmul.
    # TODO(synk): for large H/W/Cin, build the im2col tile in VMEM from padded
    # image row bands instead of round-tripping the KxK-expanded slab via HBM.
    xp = jnp.pad(x, ((0, 0), (pad, pad), (pad, pad), (0, 0)))
    patches = [xp[:, ky:ky + H, kx:kx + W, :]
               for ky in range(K) for kx in range(K)]
    col = jnp.concatenate(patches, axis=-1).reshape(N * H * W, K * K * Cin)

    M, KKC = col.shape
    kkc_pad = _round_up(KKC, _LANE)
    tm = _choose_row_tile(M)
    m_pad = _round_up(M, tm)
    col = jnp.pad(col, ((0, m_pad - M), (0, kkc_pad - KKC))).astype(jnp.bfloat16)

    # --- lane-pad all channel dims to 128; bf16 matmul operands, f32 biases.
    c1, c2, c3 = w1.shape[1], w2.shape[1], w3.shape[1]
    c1p, c2p, c3p = (_round_up(c, _LANE) for c in (c1, c2, c3))
    a_pad = _round_up(num_actions, _LANE)

    w1p = _pad2(w1, kkc_pad, c1p).astype(jnp.bfloat16)
    w2p = _pad2(w2, c1p, c2p).astype(jnp.bfloat16)
    w3p = _pad2(w3, c2p, c3p).astype(jnp.bfloat16)
    w4p = _pad2(w4, c3p, a_pad).astype(jnp.bfloat16)
    b1p = _pad2(b1, 1, c1p)
    b2p = _pad2(b2, 1, c2p)
    b3p = _pad2(b3, 1, c3p)
    b4p = _pad2(b4, 1, a_pad)

    flops = 2 * m_pad * (kkc_pad * c1p + c1p * c2p + c2p * c3p + c3p * a_pad)
    bytes_accessed = (2 * (col.size + w1p.size + w2p.size + w3p.size
                           + w4p.size + m_pad * a_pad)
                      + 4 * (b1p.size + b2p.size + b3p.size + b4p.size))

    def full(arr):
        nd = arr.ndim
        return pl.BlockSpec(arr.shape, lambda i, _nd=nd: (0,) * _nd)

    out = pl.pallas_call(
        _convnet_kernel,
        out_shape=jax.ShapeDtypeStruct((m_pad, a_pad), jnp.bfloat16),
        grid_spec=pltpu.PrefetchScalarGridSpec(
            num_scalar_prefetch=0,
            grid=(m_pad // tm,),
            in_specs=[
                pl.BlockSpec((tm, kkc_pad), lambda i: (i, 0)),
                full(w1p), full(b1p), full(w2p), full(b2p),
                full(w3p), full(b3p), full(w4p), full(b4p),
            ],
            out_specs=pl.BlockSpec((tm, a_pad), lambda i: (i, 0)),
        ),
        compiler_params=pltpu.CompilerParams(
            dimension_semantics=("parallel",),
            vmem_limit_bytes=32 * 1024 * 1024),
        cost_estimate=pl.CostEstimate(
            flops=flops, transcendentals=0, bytes_accessed=bytes_accessed),
    )(col, w1p, b1p, w2p, b2p, w3p, b3p, w4p, b4p)

    out = out[:M, :num_actions].astype(jnp.float32)
    return out.reshape(N, H * W, num_actions)


def convnet_forward(x, params, num_actions):
    """Matches ConvNet.forward: accepts (H,W,C) or (N,H,W,C); returns
    (H*W, num_actions) or (N, H*W, num_actions) in float32."""
    squeeze_batch = x.ndim == 3
    if squeeze_batch:
        x = x[None]
    out = _convnet_forward_jit(
        x.astype(jnp.float32),
        params["w1"], params["b1"], params["w2"], params["b2"],
        params["w3"], params["b3"], params["w4"], params["b4"],
        num_actions=num_actions, kernel_size=params["kernel_size"])
    return out[0] if squeeze_batch else out


def _reference_forward(x, params, num_actions):
    """Pure-JAX f32 reference (lax conv + einsums) for correctness checking."""
    squeeze = x.ndim == 3
    if squeeze:
        x = x[None]
    x = x.astype(jnp.float32)
    N, H, W, Cin = x.shape
    K = params["kernel_size"]
    c1 = params["w1"].shape[-1]
    hi = jax.lax.Precision.HIGHEST
    w1_hwio = params["w1"].reshape(K, K, Cin, c1)
    h = jax.lax.conv_general_dilated(
        x, w1_hwio, window_strides=(1, 1),
        padding=[(K // 2, K // 2), (K // 2, K // 2)],
        dimension_numbers=("NHWC", "HWIO", "NHWC"), precision=hi)
    h = _leaky_relu(h + params["b1"][0])
    h = _leaky_relu(jnp.einsum("nhwc,cd->nhwd", h, params["w2"], precision=hi)
                    + params["b2"][0])
    h = _leaky_relu(jnp.einsum("nhwc,cd->nhwd", h, params["w3"], precision=hi)
                    + params["b3"][0])
    out = jnp.einsum("nhwc,cd->nhwd", h, params["w4"], precision=hi) \
        + params["b4"][0]
    out = out.reshape(N, H * W, num_actions)
    return out[0] if squeeze else out


if __name__ == "__main__":
    # Small, module-consistent shapes.
    feature_size = 4
    embed_size = 8
    num_actions = 6
    N, H, W = 2, 16, 16

    key = jax.random.PRNGKey(0)
    kp, kx = jax.random.split(key)
    params = init_params(kp, feature_size, embed_size, num_actions,
                         kernel_size=5)
    x = jax.random.normal(kx, (N, H, W, feature_size), jnp.float32)

    out = jax.block_until_ready(convnet_forward(x, params, num_actions))
    assert out.shape == (N, H * W, num_actions), out.shape

    ref = _reference_forward(x, params, num_actions)
    max_err = float(jnp.max(jnp.abs(out - ref)))
    # bf16 MXU operands + bf16 output writeback -> looser tolerance than f32.
    assert jnp.allclose(out, ref, atol=1e-2, rtol=1e-2), max_err

    # Also exercise the 3-D (unbatched) path of forward().
    out3 = jax.block_until_ready(convnet_forward(x[0], params, num_actions))
    assert out3.shape == (H * W, num_actions), out3.shape
    ref3 = _reference_forward(x[0], params, num_actions)
    assert jnp.allclose(out3, ref3, atol=1e-2, rtol=1e-2)

    print("KERNEL_OK")
</pallas_src>

<mosaic_0001>
module attributes {stable_mosaic.version = 11 : i64} {
  func.func @_convnet_kernel(%arg0: i32, %arg1: memref<256x128xbf16, #tpu.memory_space<vmem>>, %arg2: memref<128x128xbf16, #tpu.memory_space<vmem>>, %arg3: memref<1x128xf32, #tpu.memory_space<vmem>>, %arg4: memref<128x128xbf16, #tpu.memory_space<vmem>>, %arg5: memref<1x128xf32, #tpu.memory_space<vmem>>, %arg6: memref<128x128xbf16, #tpu.memory_space<vmem>>, %arg7: memref<1x128xf32, #tpu.memory_space<vmem>>, %arg8: memref<128x128xbf16, #tpu.memory_space<vmem>>, %arg9: memref<1x128xf32, #tpu.memory_space<vmem>>, %arg10: memref<256x128xbf16, #tpu.memory_space<vmem>>) attributes {dimension_semantics = [#tpu.dimension_semantics<parallel>], iteration_bounds = array<i64: 2>, scalar_prefetch = 0 : i64, scratch_operands = 0 : i64, tpu.core_type = #tpu.core_type<tc>, window_params = [{transform_indices = @transform_0, window_bounds = array<i64: 256, 128>}, {pipeline_mode = #tpu.pipeline_mode<synchronous>, transform_indices = @transform_1, window_bounds = array<i64: 128, 128>}, {pipeline_mode = #tpu.pipeline_mode<synchronous>, transform_indices = @transform_2, window_bounds = array<i64: 1, 128>}, {pipeline_mode = #tpu.pipeline_mode<synchronous>, transform_indices = @transform_3, window_bounds = array<i64: 128, 128>}, {pipeline_mode = #tpu.pipeline_mode<synchronous>, transform_indices = @transform_4, window_bounds = array<i64: 1, 128>}, {pipeline_mode = #tpu.pipeline_mode<synchronous>, transform_indices = @transform_5, window_bounds = array<i64: 128, 128>}, {pipeline_mode = #tpu.pipeline_mode<synchronous>, transform_indices = @transform_6, window_bounds = array<i64: 1, 128>}, {pipeline_mode = #tpu.pipeline_mode<synchronous>, transform_indices = @transform_7, window_bounds = array<i64: 128, 128>}, {pipeline_mode = #tpu.pipeline_mode<synchronous>, transform_indices = @transform_8, window_bounds = array<i64: 1, 128>}, {transform_indices = @transform_9, window_bounds = array<i64: 256, 128>}]} {
    %c0 = arith.constant 0 : index
    %c0_0 = arith.constant 0 : index
    %0 = vector.load %arg1[%c0, %c0_0] : memref<256x128xbf16, #tpu.memory_space<vmem>>, vector<256x128xbf16>
    %c0_1 = arith.constant 0 : index
    %c0_2 = arith.constant 0 : index
    %1 = vector.load %arg2[%c0_1, %c0_2] : memref<128x128xbf16, #tpu.memory_space<vmem>>, vector<128x128xbf16>
    %cst = arith.constant dense<0.000000e+00> : vector<256x128xf32>
    %2 = tpu.matmul %0, %1, %cst {dimension_numbers = #tpu.dot_dimension_numbers<[1], [0], [0], [1], [0, 0, 1, 1], [], []>} : vector<256x128xbf16>, vector<128x128xbf16>, vector<256x128xf32> -> vector<256x128xf32>
    %c0_3 = arith.constant 0 : index
    %c0_4 = arith.constant 0 : index
    %3 = vector.load %arg3[%c0_3, %c0_4] : memref<1x128xf32, #tpu.memory_space<vmem>>, vector<1x128xf32>
    %4 = vector.broadcast %3 : vector<1x128xf32> to vector<256x128xf32>
    %5 = arith.addf %2, %4 : vector<256x128xf32>
    %cst_5 = arith.constant 0.000000e+00 : f32
    %6 = vector.broadcast %cst_5 : f32 to vector<256x128xf32>
    %7 = arith.cmpf ogt, %5, %6 : vector<256x128xf32>
    %cst_6 = arith.constant 0.00999999977 : f32
    %8 = vector.broadcast %cst_6 : f32 to vector<256x128xf32>
    %9 = arith.mulf %8, %5 : vector<256x128xf32>
    %10 = arith.select %7, %5, %9 : vector<256x128xi1>, vector<256x128xf32>
    %11 = arith.truncf %10 : vector<256x128xf32> to vector<256x128xbf16>
    %c0_7 = arith.constant 0 : index
    %c0_8 = arith.constant 0 : index
    %12 = vector.load %arg4[%c0_7, %c0_8] : memref<128x128xbf16, #tpu.memory_space<vmem>>, vector<128x128xbf16>
    %cst_9 = arith.constant dense<0.000000e+00> : vector<256x128xf32>
    %13 = tpu.matmul %11, %12, %cst_9 {dimension_numbers = #tpu.dot_dimension_numbers<[1], [0], [0], [1], [0, 0, 1, 1], [], []>} : vector<256x128xbf16>, vector<128x128xbf16>, vector<256x128xf32> -> vector<256x128xf32>
    %c0_10 = arith.constant 0 : index
    %c0_11 = arith.constant 0 : index
    %14 = vector.load %arg5[%c0_10, %c0_11] : memref<1x128xf32, #tpu.memory_space<vmem>>, vector<1x128xf32>
    %15 = vector.broadcast %14 : vector<1x128xf32> to vector<256x128xf32>
    %16 = arith.addf %13, %15 : vector<256x128xf32>
    %cst_12 = arith.constant 0.000000e+00 : f32
    %17 = vector.broadcast %cst_12 : f32 to vector<256x128xf32>
    %18 = arith.cmpf ogt, %16, %17 : vector<256x128xf32>
    %cst_13 = arith.constant 0.00999999977 : f32
    %19 = vector.broadcast %cst_13 : f32 to vector<256x128xf32>
    %20 = arith.mulf %19, %16 : vector<256x128xf32>
    %21 = arith.select %18, %16, %20 : vector<256x128xi1>, vector<256x128xf32>
    %22 = arith.truncf %21 : vector<256x128xf32> to vector<256x128xbf16>
    %c0_14 = arith.constant 0 : index
    %c0_15 = arith.constant 0 : index
    %23 = vector.load %arg6[%c0_14, %c0_15] : memref<128x128xbf16, #tpu.memory_space<vmem>>, vector<128x128xbf16>
    %cst_16 = arith.constant dense<0.000000e+00> : vector<256x128xf32>
    %24 = tpu.matmul %22, %23, %cst_16 {dimension_numbers = #tpu.dot_dimension_numbers<[1], [0], [0], [1], [0, 0, 1, 1], [], []>} : vector<256x128xbf16>, vector<128x128xbf16>, vector<256x128xf32> -> vector<256x128xf32>
    %c0_17 = arith.constant 0 : index
    %c0_18 = arith.constant 0 : index
    %25 = vector.load %arg7[%c0_17, %c0_18] : memref<1x128xf32, #tpu.memory_space<vmem>>, vector<1x128xf32>
    %26 = vector.broadcast %25 : vector<1x128xf32> to vector<256x128xf32>
    %27 = arith.addf %24, %26 : vector<256x128xf32>
    %cst_19 = arith.constant 0.000000e+00 : f32
    %28 = vector.broadcast %cst_19 : f32 to vector<256x128xf32>
    %29 = arith.cmpf ogt, %27, %28 : vector<256x128xf32>
    %cst_20 = arith.constant 0.00999999977 : f32
    %30 = vector.broadcast %cst_20 : f32 to vector<256x128xf32>
    %31 = arith.mulf %30, %27 : vector<256x128xf32>
    %32 = arith.select %29, %27, %31 : vector<256x128xi1>, vector<256x128xf32>
    %33 = arith.truncf %32 : vector<256x128xf32> to vector<256x128xbf16>
    %c0_21 = arith.constant 0 : index
    %c0_22 = arith.constant 0 : index
    %34 = vector.load %arg8[%c0_21, %c0_22] : memref<128x128xbf16, #tpu.memory_space<vmem>>, vector<128x128xbf16>
    %cst_23 = arith.constant dense<0.000000e+00> : vector<256x128xf32>
    %35 = tpu.matmul %33, %34, %cst_23 {dimension_numbers = #tpu.dot_dimension_numbers<[1], [0], [0], [1], [0, 0, 1, 1], [], []>} : vector<256x128xbf16>, vector<128x128xbf16>, vector<256x128xf32> -> vector<256x128xf32>
    %c0_24 = arith.constant 0 : index
    %c0_25 = arith.constant 0 : index
    %36 = vector.load %arg9[%c0_24, %c0_25] : memref<1x128xf32, #tpu.memory_space<vmem>>, vector<1x128xf32>
    %37 = vector.broadcast %36 : vector<1x128xf32> to vector<256x128xf32>
    %38 = arith.addf %35, %37 : vector<256x128xf32>
    %39 = arith.truncf %38 : vector<256x128xf32> to vector<256x128xbf16>
    %c0_26 = arith.constant 0 : index
    %c0_27 = arith.constant 0 : index
    %40 = vector.load %arg10[%c0_26, %c0_27] : memref<256x128xbf16, #tpu.memory_space<vmem>>, vector<256x128xbf16>
    tpu.vector_store %arg10[%c0_26, %c0_27], %39 {strides = array<i32>} : memref<256x128xbf16, #tpu.memory_space<vmem>>, vector<256x128xbf16>,
    return
  }
  func.func @transform_0(%arg0: i32) -> (i32, i32) {
    %c0_i32 = arith.constant 0 : i32
    %c0_i32_0 = arith.constant 0 : i32
    return %arg0, %c0_i32 : i32, i32
  }
  func.func @transform_1(%arg0: i32) -> (i32, i32) {
    %c0_i32 = arith.constant 0 : i32
    %c0_i32_0 = arith.constant 0 : i32
    %c0_i32_1 = arith.constant 0 : i32
    return %c0_i32, %c0_i32_0 : i32, i32
  }
  func.func @transform_2(%arg0: i32) -> (i32, i32) {
    %c0_i32 = arith.constant 0 : i32
    %c0_i32_0 = arith.constant 0 : i32
    %c0_i32_1 = arith.constant 0 : i32
    return %c0_i32, %c0_i32_0 : i32, i32
  }
  func.func @transform_3(%arg0: i32) -> (i32, i32) {
    %c0_i32 = arith.constant 0 : i32
    %c0_i32_0 = arith.constant 0 : i32
    %c0_i32_1 = arith.constant 0 : i32
    return %c0_i32, %c0_i32_0 : i32, i32
  }
  func.func @transform_4(%arg0: i32) -> (i32, i32) {
    %c0_i32 = arith.constant 0 : i32
    %c0_i32_0 = arith.constant 0 : i32
    %c0_i32_1 = arith.constant 0 : i32
    return %c0_i32, %c0_i32_0 : i32, i32
  }
  func.func @transform_5(%arg0: i32) -> (i32, i32) {
    %c0_i32 = arith.constant 0 : i32
    %c0_i32_0 = arith.constant 0 : i32
    %c0_i32_1 = arith.constant 0 : i32
    return %c0_i32, %c0_i32_0 : i32, i32
  }
  func.func @transform_6(%arg0: i32) -> (i32, i32) {
    %c0_i32 = arith.constant 0 : i32
    %c0_i32_0 = arith.constant 0 : i32
    %c0_i32_1 = arith.constant 0 : i32
    return %c0_i32, %c0_i32_0 : i32, i32
  }
  func.func @transform_7(%arg0: i32) -> (i32, i32) {
    %c0_i32 = arith.constant 0 : i32
    %c0_i32_0 = arith.constant 0 : i32
    %c0_i32_1 = arith.constant 0 : i32
    return %c0_i32, %c0_i32_0 : i32, i32
  }
  func.func @transform_8(%arg0: i32) -> (i32, i32) {
    %c0_i32 = arith.constant 0 : i32
    %c0_i32_0 = arith.constant 0 : i32
    %c0_i32_1 = arith.constant 0 : i32
    return %c0_i32, %c0_i32_0 : i32, i32
  }
  func.func @transform_9(%arg0: i32) -> (i32, i32) {
    %c0_i32 = arith.constant 0 : i32
    %c0_i32_0 = arith.constant 0 : i32
    return %arg0, %c0_i32 : i32, i32
  }
}

</mosaic_0001>

<llo_original>
// kernel: _convnet_forward_jit.1
$region0: #{_convnet_forward_jit.1}
  #allocation0 [shape = 'u32[]', space=smem, size = 0x4, offset = 0x4, fixed_abs, tag = 'smem constant byte address 0x4 - core index']
  #allocation1 [shape = 'u32[144,128]{1,0:T(1,128)}', space=vmem, size = 0x12000, scoped, tag = 'internal scratch']
  %s0 = inlined_call_operand.vmem [shape: bf16[512,128], index: 0, kind: input, shape index: {}]
  %s1 = inlined_call_operand.vmem [shape: bf16[128,128], index: 1, kind: input, shape index: {}]
  %s2 = inlined_call_operand.vmem [shape: f32[1,128], index: 2, kind: input, shape index: {}]
  %s3 = inlined_call_operand.vmem [shape: bf16[128,128], index: 3, kind: input, shape index: {}]
  %s4 = inlined_call_operand.vmem [shape: f32[1,128], index: 4, kind: input, shape index: {}]
  %s5 = inlined_call_operand.vmem [shape: bf16[128,128], index: 5, kind: input, shape index: {}]
  %s6 = inlined_call_operand.vmem [shape: f32[1,128], index: 6, kind: input, shape index: {}]
  %s7 = inlined_call_operand.vmem [shape: bf16[128,128], index: 7, kind: input, shape index: {}]
  %s8 = inlined_call_operand.vmem [shape: f32[1,128], index: 8, kind: input, shape index: {}]
  %s9 = inlined_call_operand.vmem [shape: bf16[512,128], index: 9, kind: output, shape index: {}]
  %s10 = sld [smem:[#allocation0]]
  $region69: #{_convnet_forward_jit.1} parent=0
    _
  %s12 = ssub.s32 1, %s10
  %s13 = scalar_select 0, %s12, %s10
  loop: start=0, step=1, limit=4
  $region2: #{_convnet_forward_jit.1} parent=0 // loop_pre_header
    _
  $region3: #{_convnet_forward_jit.1} parent=0 // loop_header
    %s15 = sphi 0, %s19
    %p16 = scmp.ge.s32.totalorder %s15, 4
    %s25 = sphi 0, %s27
    %s28 = sphi 0, %s25
    %s29 = sphi 0, %s28
    %s45 = sphi 0, %s29
    %s49 = sphi 0, %s49
    %s51 = sphi 0, %s49
    %s52 = sphi 0, %s51
    %s66 = sphi 0, %s52
    %s70 = sphi 0, %s70
    %s72 = sphi 0, %s70
    %s73 = sphi 0, %s72
    %s87 = sphi 0, %s73
    %s91 = sphi 0, %s91
    %s93 = sphi 0, %s91
    %s94 = sphi 0, %s93
    %s108 = sphi 0, %s94
    %s112 = sphi 0, %s112
    %s114 = sphi 0, %s112
    %s115 = sphi 0, %s114
    %s129 = sphi 0, %s115
    %s133 = sphi 0, %s133
    %s135 = sphi 0, %s133
    %s136 = sphi 0, %s135
    %s150 = sphi 0, %s136
    %s154 = sphi 0, %s154
    %s156 = sphi 0, %s154
    %s157 = sphi 0, %s156
    %s171 = sphi 0, %s157
    %s175 = sphi 0, %s175
    %s177 = sphi 0, %s175
    %s178 = sphi 0, %s177
    %s192 = sphi 0, %s178
    %s196 = sphi 0, %s196
    %s198 = sphi 0, %s196
    %s199 = sphi 0, %s198
    %s213 = sphi 0, %s199
    %s219 = sphi 0, %s221
    %s222 = sphi 0, %s219
    %s223 = sphi 0, %s222
    %s239 = sphi 0, %s223
  $region4: #{_convnet_forward_jit.1} parent=0 // loop_header_branch
    %18 = sbr.rel (%p16) target = $region8
  $region5: #{_convnet_forward_jit.1} parent=0 // loop_body
    %s20 = ssub.s32 %s15, 1
    %s21 = ssub.s32 %s15, 2
    %s22 = sadd.s32 %s15, 1
    %s23 = ssub.s32 %s15, %s22
    %p24 = scmp.eq.s32.totalorder %s23, 0
    %s26 = sadd.s32 %s25, 1
    %s27 = scalar_select %p24, %s25, %s26
    %p30 = pneg %p24
    %p31 = scmp.eq.s32.totalorder %s15, 1
    %p32 = por %p30, %p31
    %p33 = scmp.ne.s32.totalorder %s25, %s28
    %p34 = scmp.eq.s32.totalorder %s15, 0
    %p35 = por %p33, %p34
    %p36 = scmp.ne.s32.totalorder %s25, %s28
    %p37 = scmp.eq.s32.totalorder %s20, 1
    %p38 = por %p36, %p37
    %p39 = scmp.ne.s32.totalorder %s28, %s29
    %p40 = scmp.eq.s32.totalorder %s20, 0
    %p41 = por %p39, %p40
    %p42 = scmp.ne.s32.totalorder %s28, %s29
    %p43 = scmp.eq.s32.totalorder %s21, 1
    %p44 = por %p42, %p43
    %p46 = scmp.ne.s32.totalorder %s29, %s45
    %p47 = scmp.eq.s32.totalorder %s21, 0
    %p48 = por %p46, %p47
    %s50 = sadd.s32 %s49, 1
    %p53 = scmp.eq.s32.totalorder %s15, 1
    %p54 = scmp.ne.s32.totalorder %s49, %s51
    %p55 = scmp.eq.s32.totalorder %s15, 0
    %p56 = por %p54, %p55
    %p57 = scmp.ne.s32.totalorder %s49, %s51
    %p58 = scmp.eq.s32.totalorder %s20, 1
    %p59 = por %p57, %p58
    %p60 = scmp.ne.s32.totalorder %s51, %s52
    %p61 = scmp.eq.s32.totalorder %s20, 0
    %p62 = por %p60, %p61
    %p63 = scmp.ne.s32.totalorder %s51, %s52
    %p64 = scmp.eq.s32.totalorder %s21, 1
    %p65 = por %p63, %p64
    %p67 = scmp.ne.s32.totalorder %s52, %s66
    %p68 = scmp.eq.s32.totalorder %s21, 0
    %p69 = por %p67, %p68
    %s71 = sadd.s32 %s70, 1
    %p74 = scmp.eq.s32.totalorder %s15, 1
    %p75 = scmp.ne.s32.totalorder %s70, %s72
    %p76 = scmp.eq.s32.totalorder %s15, 0
    %p77 = por %p75, %p76
    %p78 = scmp.ne.s32.totalorder %s70, %s72
    %p79 = scmp.eq.s32.totalorder %s20, 1
    %p80 = por %p78, %p79
    %p81 = scmp.ne.s32.totalorder %s72, %s73
    %p82 = scmp.eq.s32.totalorder %s20, 0
    %p83 = por %p81, %p82
    %p84 = scmp.ne.s32.totalorder %s72, %s73
    %p85 = scmp.eq.s32.totalorder %s21, 1
    %p86 = por %p84, %p85
    %p88 = scmp.ne.s32.totalorder %s73, %s87
    %p89 = scmp.eq.s32.totalorder %s21, 0
    %p90 = por %p88, %p89
    %s92 = sadd.s32 %s91, 1
    %p95 = scmp.eq.s32.totalorder %s15, 1
    %p96 = scmp.ne.s32.totalorder %s91, %s93
    %p97 = scmp.eq.s32.totalorder %s15, 0
    %p98 = por %p96, %p97
    %p99 = scmp.ne.s32.totalorder %s91, %s93
    %p100 = scmp.eq.s32.totalorder %s20, 1
    %p101 = por %p99, %p100
    %p102 = scmp.ne.s32.totalorder %s93, %s94
    %p103 = scmp.eq.s32.totalorder %s20, 0
    %p104 = por %p102, %p103
    %p105 = scmp.ne.s32.totalorder %s93, %s94
    %p106 = scmp.eq.s32.totalorder %s21, 1
    %p107 = por %p105, %p106
    %p109 = scmp.ne.s32.totalorder %s94, %s108
    %p110 = scmp.eq.s32.totalorder %s21, 0
    %p111 = por %p109, %p110
    %s113 = sadd.s32 %s112, 1
    %p116 = scmp.eq.s32.totalorder %s15, 1
    %p117 = scmp.ne.s32.totalorder %s112, %s114
    %p118 = scmp.eq.s32.totalorder %s15, 0
    %p119 = por %p117, %p118
    %p120 = scmp.ne.s32.totalorder %s112, %s114
    %p121 = scmp.eq.s32.totalorder %s20, 1
    %p122 = por %p120, %p121
    %p123 = scmp.ne.s32.totalorder %s114, %s115
    %p124 = scmp.eq.s32.totalorder %s20, 0
    %p125 = por %p123, %p124
    %p126 = scmp.ne.s32.totalorder %s114, %s115
    %p127 = scmp.eq.s32.totalorder %s21, 1
    %p128 = por %p126, %p127
    %p130 = scmp.ne.s32.totalorder %s115, %s129
    %p131 = scmp.eq.s32.totalorder %s21, 0
    %p132 = por %p130, %p131
    %s134 = sadd.s32 %s133, 1
    %p137 = scmp.eq.s32.totalorder %s15, 1
    %p138 = scmp.ne.s32.totalorder %s133, %s135
    %p139 = scmp.eq.s32.totalorder %s15, 0
    %p140 = por %p138, %p139
    %p141 = scmp.ne.s32.totalorder %s133, %s135
    %p142 = scmp.eq.s32.totalorder %s20, 1
    %p143 = por %p141, %p142
    %p144 = scmp.ne.s32.totalorder %s135, %s136
    %p145 = scmp.eq.s32.totalorder %s20, 0
    %p146 = por %p144, %p145
    %p147 = scmp.ne.s32.totalorder %s135, %s136
    %p148 = scmp.eq.s32.totalorder %s21, 1
    %p149 = por %p147, %p148
    %p151 = scmp.ne.s32.totalorder %s136, %s150
    %p152 = scmp.eq.s32.totalorder %s21, 0
    %p153 = por %p151, %p152
    %s155 = sadd.s32 %s154, 1
    %p158 = scmp.eq.s32.totalorder %s15, 1
    %p159 = scmp.ne.s32.totalorder %s154, %s156
    %p160 = scmp.eq.s32.totalorder %s15, 0
    %p161 = por %p159, %p160
    %p162 = scmp.ne.s32.totalorder %s154, %s156
    %p163 = scmp.eq.s32.totalorder %s20, 1
    %p164 = por %p162, %p163
    %p165 = scmp.ne.s32.totalorder %s156, %s157
    %p166 = scmp.eq.s32.totalorder %s20, 0
    %p167 = por %p165, %p166
    %p168 = scmp.ne.s32.totalorder %s156, %s157
    %p169 = scmp.eq.s32.totalorder %s21, 1
    %p170 = por %p168, %p169
    %p172 = scmp.ne.s32.totalorder %s157, %s171
    %p173 = scmp.eq.s32.totalorder %s21, 0
    %p174 = por %p172, %p173
    %s176 = sadd.s32 %s175, 1
    %p179 = scmp.eq.s32.totalorder %s15, 1
    %p180 = scmp.ne.s32.totalorder %s175, %s177
    %p181 = scmp.eq.s32.totalorder %s15, 0
    %p182 = por %p180, %p181
    %p183 = scmp.ne.s32.totalorder %s175, %s177
    %p184 = scmp.eq.s32.totalorder %s20, 1
    %p185 = por %p183, %p184
    %p186 = scmp.ne.s32.totalorder %s177, %s178
    %p187 = scmp.eq.s32.totalorder %s20, 0
    %p188 = por %p186, %p187
    %p189 = scmp.ne.s32.totalorder %s177, %s178
    %p190 = scmp.eq.s32.totalorder %s21, 1
    %p191 = por %p189, %p190
    %p193 = scmp.ne.s32.totalorder %s178, %s192
    %p194 = scmp.eq.s32.totalorder %s21, 0
    %p195 = por %p193, %p194
    %s197 = sadd.s32 %s196, 1
    %p200 = scmp.eq.s32.totalorder %s15, 1
    %p201 = scmp.ne.s32.totalorder %s196, %s198
    %p202 = scmp.eq.s32.totalorder %s15, 0
    %p203 = por %p201, %p202
    %p204 = scmp.ne.s32.totalorder %s196, %s198
    %p205 = scmp.eq.s32.totalorder %s20, 1
    %p206 = por %p204, %p205
    %p207 = scmp.ne.s32.totalorder %s198, %s199
    %p208 = scmp.eq.s32.totalorder %s20, 0
    %p209 = por %p207, %p208
    %p210 = scmp.ne.s32.totalorder %s198, %s199
    %p211 = scmp.eq.s32.totalorder %s21, 1
    %p212 = por %p210, %p211
    %p214 = scmp.ne.s32.totalorder %s199, %s213
    %p215 = scmp.eq.s32.totalorder %s21, 0
    %p216 = por %p214, %p215
    %s217 = ssub.s32 %s15, %s22
    %p218 = scmp.eq.s32.totalorder %s217, 0
    %s220 = sadd.s32 %s219, 1
    %s221 = scalar_select %p218, %s219, %s220
    %p224 = pneg %p218
    %p225 = scmp.eq.s32.totalorder %s15, 1
    %p226 = por %p224, %p225
    %p227 = scmp.ne.s32.totalorder %s219, %s222
    %p228 = scmp.eq.s32.totalorder %s15, 0
    %p229 = por %p227, %p228
    %p230 = scmp.ne.s32.totalorder %s219, %s222
    %p231 = scmp.eq.s32.totalorder %s20, 1
    %p232 = por %p230, %p231
    %p233 = scmp.ne.s32.totalorder %s222, %s223
    %p234 = scmp.eq.s32.totalorder %s20, 0
    %p235 = por %p233, %p234
    %p236 = scmp.ne.s32.totalorder %s222, %s223
    %p237 = scmp.eq.s32.totalorder %s21, 1
    %p238 = por %p236, %p237
    %p240 = scmp.ne.s32.totalorder %s223, %s239
    %p241 = scmp.eq.s32.totalorder %s21, 0
    %p242 = por %p240, %p241
    %p243 = scmp.le.s32.totalorder 1, %s15
    %p244 = scmp.lt.s32.totalorder %s15, 3
    %p245 = pnand %p243, %p244
    %p246 = pneg %p245
    // Predicated region
    $region9: #{_convnet_forward_jit.1} parent=5 // pred_check
      _
    $region10: #{_convnet_forward_jit.1} parent=5 // pred_check_branch
      %248 = sbr.rel (%p245) target = $region12
    $region11: #{_convnet_forward_jit.1} parent=5 // pred_region
      %s249 = ssub.s32 %s15, 1
      // Predicated region
      $region13: #{_convnet_forward_jit.1} parent=11 // pred_check
        %p250 = pneg %p62
      $region14: #{_convnet_forward_jit.1} parent=11 // pred_check_branch
        %252 = sbr.rel (%p250) target = $region16
      $region15: #{_convnet_forward_jit.1} parent=11 // pred_region
        _
      $region16: #{_convnet_forward_jit.1} parent=11 // pred_fallthru
        _
      // Predicated region
      $region17: #{_convnet_forward_jit.1} parent=11 // pred_check
        %p253 = pneg %p83
      $region18: #{_convnet_forward_jit.1} parent=11 // pred_check_branch
        %255 = sbr.rel (%p253) target = $region20
      $region19: #{_convnet_forward_jit.1} parent=11 // pred_region
        _
      $region20: #{_convnet_forward_jit.1} parent=11 // pred_fallthru
        _
      // Predicated region
      $region21: #{_convnet_forward_jit.1} parent=11 // pred_check
        %p256 = pneg %p104
      $region22: #{_convnet_forward_jit.1} parent=11 // pred_check_branch
        %258 = sbr.rel (%p256) target = $region24
      $region23: #{_convnet_forward_jit.1} parent=11 // pred_region
        _
      $region24: #{_convnet_forward_jit.1} parent=11 // pred_fallthru
        _
      // Predicated region
      $region25: #{_convnet_forward_jit.1} parent=11 // pred_check
        %p259 = pneg %p125
      $region26: #{_convnet_forward_jit.1} parent=11 // pred_check_branch
        %261 = sbr.rel (%p259) target = $region28
      $region27: #{_convnet_forward_jit.1} parent=11 // pred_region
        _
      $region28: #{_convnet_forward_jit.1} parent=11 // pred_fallthru
        _
      // Predicated region
      $region29: #{_convnet_forward_jit.1} parent=11 // pred_check
        %p262 = pneg %p146
      $region30: #{_convnet_forward_jit.1} parent=11 // pred_check_branch
        %264 = sbr.rel (%p262) target = $region32
      $region31: #{_convnet_forward_jit.1} parent=11 // pred_region
        _
      $region32: #{_convnet_forward_jit.1} parent=11 // pred_fallthru
        _
      // Predicated region
      $region33: #{_convnet_forward_jit.1} parent=11 // pred_check
        %p265 = pneg %p167
      $region34: #{_convnet_forward_jit.1} parent=11 // pred_check_branch
        %267 = sbr.rel (%p265) target = $region36
      $region35: #{_convnet_forward_jit.1} parent=11 // pred_region
        _
      $region36: #{_convnet_forward_jit.1} parent=11 // pred_fallthru
        _
      // Predicated region
      $region37: #{_convnet_forward_jit.1} parent=11 // pred_check
        %p268 = pneg %p188
      $region38: #{_convnet_forward_jit.1} parent=11 // pred_check_branch
        %270 = sbr.rel (%p268) target = $region40
      $region39: #{_convnet_forward_jit.1} parent=11 // pred_region
        _
      $region40: #{_convnet_forward_jit.1} parent=11 // pred_fallthru
        _
      // Predicated region
      $region41: #{_convnet_forward_jit.1} parent=11 // pred_check
        %p271 = pneg %p209
      $region42: #{_convnet_forward_jit.1} parent=11 // pred_check_branch
        %273 = sbr.rel (%p271) target = $region44
      $region43: #{_convnet_forward_jit.1} parent=11 // pred_region
        _
      $region44: #{_convnet_forward_jit.1} parent=11 // pred_fallthru
        _
    $region12: #{_convnet_forward_jit.1} parent=5 // pred_fallthru
      _
    %p274 = scmp.lt.s32.totalorder %s15, 2
    // Predicated region
    $region45: #{_convnet_forward_jit.1} parent=5 // pred_check
      %p275 = pneg %p274
    $region46: #{_convnet_forward_jit.1} parent=5 // pred_check_branch
      %277 = sbr.rel (%p275) target = $region48
    $region47: #{_convnet_forward_jit.1} parent=5 // pred_region
      // Predicated region
      $region49: #{_convnet_forward_jit.1} parent=47 // pred_check
        %p278 = pneg %p35
      $region50: #{_convnet_forward_jit.1} parent=47 // pred_check_branch
        %280 = sbr.rel (%p278) target = $region52
      $region51: #{_convnet_forward_jit.1} parent=47 // pred_region
        %s281 = smul.u32 32, %s15
        %p282 = scmp.lt.s32.totalorder %s281, 63
        %s283 = scalar_select %p282, %s281, 63
        %s284 = smul.addr %s283, 4
        %s285 = scalar_lea.vmem %s0, %s284
        %s286 = smul.u32 32, %s15
      $region52: #{_convnet_forward_jit.1} parent=47 // pred_fallthru
        _
    $region48: #{_convnet_forward_jit.1} parent=5 // pred_fallthru
      _
    %p287 = scmp.le.s32.totalorder 1, %s15
    %p288 = scmp.lt.s32.totalorder %s15, 3
    %p289 = pnand %p287, %p288
    %p290 = pneg %p289
    // Predicated region
    $region53: #{_convnet_forward_jit.1} parent=5 // pred_check
      _
    $region54: #{_convnet_forward_jit.1} parent=5 // pred_check_branch
      %292 = sbr.rel (%p289) target = $region56
    $region55: #{_convnet_forward_jit.1} parent=5 // pred_region
      %s293 = ssub.s32 %s15, 1
      %s294 = smul.u32 32, %s20
      %p295 = scmp.lt.s32.totalorder %s294, 63
      %s296 = scalar_select %p295, %s294, 63
      %s297 = smul.addr %s296, 4
      %s298 = scalar_lea.vmem %s0, %s297
      %p299 = pneg %p41
      %p300 = pneg %p38
      %p301 = pneg %p62
      %p302 = pneg %p59
      %p303 = pneg %p83
      %p304 = pneg %p80
      %p305 = pneg %p104
      %p306 = pneg %p101
      %p307 = pneg %p125
      %p308 = pneg %p122
      %p309 = pneg %p146
      %p310 = pneg %p143
      %p311 = pneg %p167
      %p312 = pneg %p164
      %p313 = pneg %p188
      %p314 = pneg %p185
      %p315 = pneg %p209
      %p316 = pneg %p206
      %p317 = pneg %p235
      %p318 = pneg %p232
      %s319 = smul.u32 32, %s20
      %p320 = scmp.lt.s32.totalorder %s319, 63
      %s321 = scalar_select %p320, %s319, 63
      %s322 = smul.addr %s321, 4
      %s323 = scalar_lea.vmem %s9, %s322
      %s324 = smul.u32 32, %s20
      %p325 = scmp.lt.s32.totalorder %s324, 63
      %s326 = scalar_select %p325, %s324, 63
      %s327 = smul.addr %s326, 4
      %s328 = scalar_lea.vmem %s0, %s327
      %s329 = smul.u32 32, %s20
      %s330 = smul.u32 32, %s20
      %p331 = scmp.lt.s32.totalorder %s330, 63
      %s332 = scalar_select %p331, %s330, 63
      %s333 = smul.addr %s332, 4
      %s334 = scalar_lea.vmem %s9, %s333
      %s335 = smul.u32 32, %s20
      %v337 = vld [vmem:[%s328] sm:$0xf]
      %v338 = vld [vmem:[%s328 + $0x4] sm:$0xf]
      %v339 = vld [vmem:[%s328 + $0x8] sm:$0xf]
      %v340 = vld [vmem:[%s328 + $0xc] sm:$0xf]
      %v341 = vld [vmem:[%s328 + $0x10] sm:$0xf]
      %v342 = vld [vmem:[%s328 + $0x14] sm:$0xf]
      %v343 = vld [vmem:[%s328 + $0x18] sm:$0xf]
      %v344 = vld [vmem:[%s328 + $0x1c] sm:$0xf]
      %v345 = vld [vmem:[%s328 + $0x20] sm:$0xf]
      %v346 = vld [vmem:[%s328 + $0x24] sm:$0xf]
      %v347 = vld [vmem:[%s328 + $0x28] sm:$0xf]
      %v348 = vld [vmem:[%s328 + $0x2c] sm:$0xf]
      %v349 = vld [vmem:[%s328 + $0x30] sm:$0xf]
      %v350 = vld [vmem:[%s328 + $0x34] sm:$0xf]
      %v351 = vld [vmem:[%s328 + $0x38] sm:$0xf]
      %v352 = vld [vmem:[%s328 + $0x3c] sm:$0xf]
      %v353 = vld [vmem:[%s328 + $0x40] sm:$0xf]
      %v354 = vld [vmem:[%s328 + $0x44] sm:$0xf]
      %v355 = vld [vmem:[%s328 + $0x48] sm:$0xf]
      %v356 = vld [vmem:[%s328 + $0x4c] sm:$0xf]
      %v357 = vld [vmem:[%s328 + $0x50] sm:$0xf]
      %v358 = vld [vmem:[%s328 + $0x54] sm:$0xf]
      %v359 = vld [vmem:[%s328 + $0x58] sm:$0xf]
      %v360 = vld [vmem:[%s328 + $0x5c] sm:$0xf]
      %v361 = vld [vmem:[%s328 + $0x60] sm:$0xf]
      %v362 = vld [vmem:[%s328 + $0x64] sm:$0xf]
      %v363 = vld [vmem:[%s328 + $0x68] sm:$0xf]
      %v364 = vld [vmem:[%s328 + $0x6c] sm:$0xf]
      %v365 = vld [vmem:[%s328 + $0x70] sm:$0xf]
      %v366 = vld [vmem:[%s328 + $0x74] sm:$0xf]
      %v367 = vld [vmem:[%s328 + $0x78] sm:$0xf]
      %v368 = vld [vmem:[%s328 + $0x7c] sm:$0xf]
      %v369 = vld [vmem:[%s1] sm:$0xf]
      %v370 = vld [vmem:[%s1 + $0x4] sm:$0xf]
      %v371 = vld [vmem:[%s1 + $0x8] sm:$0xf]
      %v372 = vld [vmem:[%s1 + $0xc] sm:$0xf]
      %v373 = vld [vmem:[%s1 + $0x10] sm:$0xf]
      %v374 = vld [vmem:[%s1 + $0x14] sm:$0xf]
      %v375 = vld [vmem:[%s1 + $0x18] sm:$0xf]
      %v376 = vld [vmem:[%s1 + $0x1c] sm:$0xf]
      %v377 = vld [vmem:[%s1 + $0x20] sm:$0xf]
      %v378 = vld [vmem:[%s1 + $0x24] sm:$0xf]
      %v379 = vld [vmem:[%s1 + $0x28] sm:$0xf]
      %v380 = vld [vmem:[%s1 + $0x2c] sm:$0xf]
      %v381 = vld [vmem:[%s1 + $0x30] sm:$0xf]
      %v382 = vld [vmem:[%s1 + $0x34] sm:$0xf]
      %v383 = vld [vmem:[%s1 + $0x38] sm:$0xf]
      %v384 = vld [vmem:[%s1 + $0x3c] sm:$0xf]
      %v385 = vld [vmem:[%s2] sm:$0x1]
      %v387 = vlaneseq
      %v388 = vshrl.u32 %v387, 7
      %v389 = vsub.s32 0, %v388
      %v390 = vrot.slane %v385, %v389
      %v424 = vunpack.c.l.b16 %v337
      %v425 = vunpack.c.l.b16 %v338
      %v426 = vunpack.c.l.b16 %v339
      %v427 = vunpack.c.l.b16 %v340
      %v428 = vunpack.c.l.b16 %v341
      %v429 = vunpack.c.l.b16 %v342
      %v430 = vunpack.c.l.b16 %v343
      %v431 = vunpack.c.l.b16 %v344
      %v432 = vunpack.c.l.b16 %v345
      %v433 = vunpack.c.l.b16 %v346
      %v434 = vunpack.c.l.b16 %v347
      %v435 = vunpack.c.l.b16 %v348
      %v436 = vunpack.c.l.b16 %v349
      %v437 = vunpack.c.l.b16 %v350
      %v438 = vunpack.c.l.b16 %v351
      %v439 = vunpack.c.l.b16 %v352
      %v440 = vunpack.c.l.b16 %v353
      %v441 = vunpack.c.l.b16 %v354
      %v442 = vunpack.c.l.b16 %v355
      %v443 = vunpack.c.l.b16 %v356
      %v444 = vunpack.c.l.b16 %v357
      %v445 = vunpack.c.l.b16 %v358
      %v446 = vunpack.c.l.b16 %v359
      %v447 = vunpack.c.l.b16 %v360
      %v448 = vunpack.c.l.b16 %v361
      %v449 = vunpack.c.l.b16 %v362
      %v450 = vunpack.c.l.b16 %v363
      %v451 = vunpack.c.l.b16 %v364
      %v452 = vunpack.c.l.b16 %v365
      %v453 = vunpack.c.l.b16 %v366
      %v454 = vunpack.c.l.b16 %v367
      %v455 = vunpack.c.l.b16 %v368
      %v456 = vpack.c.b16 %v425, %v424
      %v457 = vpack.c.b16 %v427, %v426
      %v458 = vpack.c.b16 %v429, %v428
      %v459 = vpack.c.b16 %v431, %v430
      %v460 = vpack.c.b16 %v433, %v432
      %v461 = vpack.c.b16 %v435, %v434
      %v462 = vpack.c.b16 %v437, %v436
      %v463 = vpack.c.b16 %v439, %v438
      %v464 = vpack.c.b16 %v441, %v440
      %v465 = vpack.c.b16 %v443, %v442
      %v466 = vpack.c.b16 %v445, %v444
      %v467 = vpack.c.b16 %v447, %v446
      %v468 = vpack.c.b16 %v449, %v448
      %v469 = vpack.c.b16 %v451, %v450
      %v470 = vpack.c.b16 %v453, %v452
      %v471 = vpack.c.b16 %v455, %v454
      %v504 = vunpack.c.l.b16 %v369
      %v505 = vunpack.c.l.b16 %v370
      %v506 = vunpack.c.l.b16 %v371
      %v507 = vunpack.c.l.b16 %v372
      %v508 = vunpack.c.l.b16 %v373
      %v509 = vunpack.c.l.b16 %v374
      %v510 = vunpack.c.l.b16 %v375
      %v511 = vunpack.c.l.b16 %v376
      %v512 = vunpack.c.l.b16 %v377
      %v513 = vunpack.c.l.b16 %v378
      %v514 = vunpack.c.l.b16 %v379
      %v515 = vunpack.c.l.b16 %v380
      %v516 = vunpack.c.l.b16 %v381
      %v517 = vunpack.c.l.b16 %v382
      %v518 = vunpack.c.l.b16 %v383
      %v519 = vunpack.c.l.b16 %v384
      %v520 = vpack.c.b16 %v505, %v504
      %v521 = vpack.c.b16 %v507, %v506
      %v522 = vpack.c.b16 %v509, %v508
      %v523 = vpack.c.b16 %v511, %v510
      %v524 = vpack.c.b16 %v513, %v512
      %v525 = vpack.c.b16 %v515, %v514
      %v526 = vpack.c.b16 %v517, %v516
      %v527 = vpack.c.b16 %v519, %v518
      %536 = vmatprep.subr.bf16.mxu0 0
      %537 = vmatpush1.bf16.msra.mxu0 %v527
      %538 = vmatprep.subr.bf16.mxu0 0
      %539 = vmatpush1.bf16.msra.mxu0 %v526
      %540 = vmatprep.subr.bf16.mxu0 0
      %541 = vmatpush1.bf16.msra.mxu0 %v525
      %542 = vmatprep.subr.bf16.mxu0 0
      %543 = vmatpush1.bf16.msra.mxu0 %v524
      %544 = vmatprep.subr.bf16.mxu0 0
      %545 = vmatpush1.bf16.msra.mxu0 %v523
      %546 = vmatprep.subr.bf16.mxu0 0
      %547 = vmatpush1.bf16.msra.mxu0 %v522
      %548 = vmatprep.subr.bf16.mxu0 0
      %549 = vmatpush1.bf16.msra.mxu0 %v521
      %550 = vmatprep.subr.bf16.mxu0 0
      %551 = vmatpush1.bf16.msra.mxu0 %v520
      %552 = vmatprep.subr.bf16.mxu0 0
      %553 = vmatpush2.bf16.msra.mxu0 0
      %554 = vmatprep.subr.bf16.mxu0 0
      %555 = vmatpush2.bf16.msra.mxu0 0
      %556 = vmatprep.subr.bf16.mxu0 0
      %557 = vmatpush2.bf16.msra.mxu0 0
      %558 = vmatprep.subr.bf16.mxu0 0
      %559 = vmatpush2.bf16.msra.mxu0 0
      %560 = vmatprep.subr.bf16.mxu0 0
      %561 = vmatpush2.bf16.msra.mxu0 0
      %562 = vmatprep.subr.bf16.mxu0 0
      %563 = vmatpush2.bf16.msra.mxu0 0
      %564 = vmatprep.subr.bf16.mxu0 0
      %565 = vmatpush2.bf16.msra.mxu0 0
      %566 = vmatprep.subr.bf16.mxu0 0
      %567 = vmatpush2.bf16.msra.mxu0 0
      %568 = vmatprep.mubr.bf16.mxu0 0
      %569 = vmatmul.mubr.bf16.gmra.mxu0 %v456
      %v570 = vpop.f32.mrf.mxu0
      %v571 = vadd.f32 %v390, %v570
      %v572 = vpop.f32.mrf.mxu0
      %v573 = vpop.f32.mrf.mxu0
      %v574 = vadd.f32 %v390, %v573
      %v575 = vpop.f32.mrf.mxu0
      %576 = vmatprep.mubr.bf16.mxu0 0
      %577 = vmatmul.mubr.bf16.gmra.mxu0 %v457
      %v578 = vpop.f32.mrf.mxu0
      %v579 = vadd.f32 %v390, %v578
      %v580 = vpop.f32.mrf.mxu0
      %v581 = vpop.f32.mrf.mxu0
      %v582 = vadd.f32 %v390, %v581
      %v583 = vpop.f32.mrf.mxu0
      %584 = vmatprep.mubr.bf16.mxu0 0
      %585 = vmatmul.mubr.bf16.gmra.mxu0 %v458
      %v586 = vpop.f32.mrf.mxu0
      %v587 = vadd.f32 %v390, %v586
      %v588 = vpop.f32.mrf.mxu0
      %v589 = vpop.f32.mrf.mxu0
      %v590 = vadd.f32 %v390, %v589
      %v591 = vpop.f32.mrf.mxu0
      %592 = vmatprep.mubr.bf16.mxu0 0
      %593 = vmatmul.mubr.bf16.gmra.mxu0 %v459
      %v594 = vpop.f32.mrf.mxu0
      %v595 = vadd.f32 %v390, %v594
      %v596 = vpop.f32.mrf.mxu0
      %v597 = vpop.f32.mrf.mxu0
      %v598 = vadd.f32 %v390, %v597
      %v599 = vpop.f32.mrf.mxu0
      %600 = vmatprep.mubr.bf16.mxu0 0
      %601 = vmatmul.mubr.bf16.gmra.mxu0 %v460
      %v602 = vpop.f32.mrf.mxu0
      %v603 = vadd.f32 %v390, %v602
      %v604 = vpop.f32.mrf.mxu0
      %v605 = vpop.f32.mrf.mxu0
      %v606 = vadd.f32 %v390, %v605
      %v607 = vpop.f32.mrf.mxu0
      %608 = vmatprep.mubr.bf16.mxu0 0
      %609 = vmatmul.mubr.bf16.gmra.mxu0 %v461
      %v610 = vpop.f32.mrf.mxu0
      %v611 = vadd.f32 %v390, %v610
      %v612 = vpop.f32.mrf.mxu0
      %v613 = vpop.f32.mrf.mxu0
      %v614 = vadd.f32 %v390, %v613
      %v615 = vpop.f32.mrf.mxu0
      %616 = vmatprep.mubr.bf16.mxu0 0
      %617 = vmatmul.mubr.bf16.gmra.mxu0 %v462
      %v618 = vpop.f32.mrf.mxu0
      %v619 = vadd.f32 %v390, %v618
      %v620 = vpop.f32.mrf.mxu0
      %v621 = vpop.f32.mrf.mxu0
      %v622 = vadd.f32 %v390, %v621
      %v623 = vpop.f32.mrf.mxu0
      %624 = vmatprep.mubr.bf16.mxu0 0
      %625 = vmatmul.mubr.bf16.gmra.mxu0 %v463
      %v626 = vpop.f32.mrf.mxu0
      %v627 = vadd.f32 %v390, %v626
      %v628 = vpop.f32.mrf.mxu0
      %v629 = vpop.f32.mrf.mxu0
      %v630 = vadd.f32 %v390, %v629
      %v631 = vpop.f32.mrf.mxu0
      %632 = vmatprep.mubr.bf16.mxu0 0
      %633 = vmatmul.mubr.bf16.gmra.mxu0 %v464
      %v634 = vpop.f32.mrf.mxu0
      %v635 = vadd.f32 %v390, %v634
      %v636 = vpop.f32.mrf.mxu0
      %v637 = vpop.f32.mrf.mxu0
      %v638 = vadd.f32 %v390, %v637
      %v639 = vpop.f32.mrf.mxu0
      %640 = vmatprep.mubr.bf16.mxu0 0
      %641 = vmatmul.mubr.bf16.gmra.mxu0 %v465
      %v642 = vpop.f32.mrf.mxu0
      %v643 = vadd.f32 %v390, %v642
      %v644 = vpop.f32.mrf.mxu0
      %v645 = vpop.f32.mrf.mxu0
      %v646 = vadd.f32 %v390, %v645
      %v647 = vpop.f32.mrf.mxu0
      %648 = vmatprep.mubr.bf16.mxu0 0
      %649 = vmatmul.mubr.bf16.gmra.mxu0 %v466
      %v650 = vpop.f32.mrf.mxu0
      %v651 = vadd.f32 %v390, %v650
      %v652 = vpop.f32.mrf.mxu0
      %v653 = vpop.f32.mrf.mxu0
      %v654 = vadd.f32 %v390, %v653
      %v655 = vpop.f32.mrf.mxu0
      %656 = vmatprep.mubr.bf16.mxu0 0
      %657 = vmatmul.mubr.bf16.gmra.mxu0 %v467
      %v658 = vpop.f32.mrf.mxu0
      %v659 = vadd.f32 %v390, %v658
      %v660 = vpop.f32.mrf.mxu0
      %v661 = vpop.f32.mrf.mxu0
      %v662 = vadd.f32 %v390, %v661
      %v663 = vpop.f32.mrf.mxu0
      %664 = vmatprep.mubr.bf16.mxu0 0
      %665 = vmatmul.mubr.bf16.gmra.mxu0 %v468
      %v666 = vpop.f32.mrf.mxu0
      %v667 = vadd.f32 %v390, %v666
      %v668 = vpop.f32.mrf.mxu0
      %v669 = vpop.f32.mrf.mxu0
      %v670 = vadd.f32 %v390, %v669
      %v671 = vpop.f32.mrf.mxu0
      %672 = vmatprep.mubr.bf16.mxu0 0
      %673 = vmatmul.mubr.bf16.gmra.mxu0 %v469
      %v674 = vpop.f32.mrf.mxu0
      %v675 = vadd.f32 %v390, %v674
      %v676 = vpop.f32.mrf.mxu0
      %v677 = vpop.f32.mrf.mxu0
      %v678 = vadd.f32 %v390, %v677
      %v679 = vpop.f32.mrf.mxu0
      %680 = vmatprep.mubr.bf16.mxu0 0
      %681 = vmatmul.mubr.bf16.gmra.mxu0 %v470
      %v682 = vpop.f32.mrf.mxu0
      %v683 = vadd.f32 %v390, %v682
      %v684 = vpop.f32.mrf.mxu0
      %v685 = vpop.f32.mrf.mxu0
      %v686 = vadd.f32 %v390, %v685
      %v687 = vpop.f32.mrf.mxu0
      %688 = vmatprep.mubr.bf16.mxu0 0
      %689 = vmatmul.mubr.bf16.gmra.mxu0 %v471
      %v690 = vpop.f32.mrf.mxu0
      %v691 = vadd.f32 %v390, %v690
      %v692 = vpop.f32.mrf.mxu0
      %v693 = vpop.f32.mrf.mxu0
      %v694 = vadd.f32 %v390, %v693
      %v695 = vpop.f32.mrf.mxu0
      %696 = vdwg.mxu0
      %vm697 = vcmp.gt.f32.partialorder %v571, 0.0
      %vm698 = vcmp.gt.f32.partialorder %v574, 0.0
      %vm699 = vcmp.gt.f32.partialorder %v579, 0.0
      %vm700 = vcmp.gt.f32.partialorder %v582, 0.0
      %vm701 = vcmp.gt.f32.partialorder %v587, 0.0
      %vm702 = vcmp.gt.f32.partialorder %v590, 0.0
      %vm703 = vcmp.gt.f32.partialorder %v595, 0.0
      %vm704 = vcmp.gt.f32.partialorder %v598, 0.0
      %vm705 = vcmp.gt.f32.partialorder %v603, 0.0
      %vm706 = vcmp.gt.f32.partialorder %v606, 0.0
      %vm707 = vcmp.gt.f32.partialorder %v611, 0.0
      %vm708 = vcmp.gt.f32.partialorder %v614, 0.0
      %vm709 = vcmp.gt.f32.partialorder %v619, 0.0
      %vm710 = vcmp.gt.f32.partialorder %v622, 0.0
      %vm711 = vcmp.gt.f32.partialorder %v627, 0.0
      %vm712 = vcmp.gt.f32.partialorder %v630, 0.0
      %vm713 = vcmp.gt.f32.partialorder %v635, 0.0
      %vm714 = vcmp.gt.f32.partialorder %v638, 0.0
      %vm715 = vcmp.gt.f32.partialorder %v643, 0.0
      %vm716 = vcmp.gt.f32.partialorder %v646, 0.0
      %vm717 = vcmp.gt.f32.partialorder %v651, 0.0
      %vm718 = vcmp.gt.f32.partialorder %v654, 0.0
      %vm719 = vcmp.gt.f32.partialorder %v659, 0.0
      %vm720 = vcmp.gt.f32.partialorder %v662, 0.0
      %vm721 = vcmp.gt.f32.partialorder %v667, 0.0
      %vm722 = vcmp.gt.f32.partialorder %v670, 0.0
      %vm723 = vcmp.gt.f32.partialorder %v675, 0.0
      %vm724 = vcmp.gt.f32.partialorder %v678, 0.0
      %vm725 = vcmp.gt.f32.partialorder %v683, 0.0
      %vm726 = vcmp.gt.f32.partialorder %v686, 0.0
      %vm727 = vcmp.gt.f32.partialorder %v691, 0.0
      %vm728 = vcmp.gt.f32.partialorder %v694, 0.0
      %v729 = vmul.f32 %v571, 0.01
      %v730 = vmul.f32 %v574, 0.01
      %v731 = vmul.f32 %v579, 0.01
      %v732 = vmul.f32 %v582, 0.01
      %v733 = vmul.f32 %v587, 0.01
      %v734 = vmul.f32 %v590, 0.01
      %v735 = vmul.f32 %v595, 0.01
      %v736 = vmul.f32 %v598, 0.01
      %v737 = vmul.f32 %v603, 0.01
      %v738 = vmul.f32 %v606, 0.01
      %v739 = vmul.f32 %v611, 0.01
      %v740 = vmul.f32 %v614, 0.01
      %v741 = vmul.f32 %v619, 0.01
      %v742 = vmul.f32 %v622, 0.01
      %v743 = vmul.f32 %v627, 0.01
      %v744 = vmul.f32 %v630, 0.01
      %v745 = vmul.f32 %v635, 0.01
      %v746 = vmul.f32 %v638, 0.01
      %v747 = vmul.f32 %v643, 0.01
      %v748 = vmul.f32 %v646, 0.01
      %v749 = vmul.f32 %v651, 0.01
      %v750 = vmul.f32 %v654, 0.01
      %v751 = vmul.f32 %v659, 0.01
      %v752 = vmul.f32 %v662, 0.01
      %v753 = vmul.f32 %v667, 0.01
      %v754 = vmul.f32 %v670, 0.01
      %v755 = vmul.f32 %v675, 0.01
      %v756 = vmul.f32 %v678, 0.01
      %v757 = vmul.f32 %v683, 0.01
      %v758 = vmul.f32 %v686, 0.01
      %v759 = vmul.f32 %v691, 0.01
      %v760 = vmul.f32 %v694, 0.01
      %v761 = vsel %vm697, %v571, %v729
      %v762 = vsel %vm698, %v574, %v730
      %v763 = vsel %vm699, %v579, %v731
      %v764 = vsel %vm700, %v582, %v732
      %v765 = vsel %vm701, %v587, %v733
      %v766 = vsel %vm702, %v590, %v734
      %v767 = vsel %vm703, %v595, %v735
      %v768 = vsel %vm704, %v598, %v736
      %v769 = vsel %vm705, %v603, %v737
      %v770 = vsel %vm706, %v606, %v738
      %v771 = vsel %vm707, %v611, %v739
      %v772 = vsel %vm708, %v614, %v740
      %v773 = vsel %vm709, %v619, %v741
      %v774 = vsel %vm710, %v622, %v742
      %v775 = vsel %vm711, %v627, %v743
      %v776 = vsel %vm712, %v630, %v744
      %v777 = vsel %vm713, %v635, %v745
      %v778 = vsel %vm714, %v638, %v746
      %v779 = vsel %vm715, %v643, %v747
      %v780 = vsel %vm716, %v646, %v748
      %v781 = vsel %vm717, %v651, %v749
      %v782 = vsel %vm718, %v654, %v750
      %v783 = vsel %vm719, %v659, %v751
      %v784 = vsel %vm720, %v662, %v752
      %v785 = vsel %vm721, %v667, %v753
      %v786 = vsel %vm722, %v670, %v754
      %v787 = vsel %vm723, %v675, %v755
      %v788 = vsel %vm724, %v678, %v756
      %v789 = vsel %vm725, %v683, %v757
      %v790 = vsel %vm726, %v686, %v758
      %v791 = vsel %vm727, %v691, %v759
      %v792 = vsel %vm728, %v694, %v760
      %v793 = vpack.c.bf16 %v762, %v761
      %v794 = vpack.c.bf16 %v764, %v763
      %v795 = vpack.c.bf16 %v766, %v765
      %v796 = vpack.c.bf16 %v768, %v767
      %v797 = vpack.c.bf16 %v770, %v769
      %v798 = vpack.c.bf16 %v772, %v771
      %v799 = vpack.c.bf16 %v774, %v773
      %v800 = vpack.c.bf16 %v776, %v775
      %v801 = vpack.c.bf16 %v778, %v777
      %v802 = vpack.c.bf16 %v780, %v779
      %v803 = vpack.c.bf16 %v782, %v781
      %v804 = vpack.c.bf16 %v784, %v783
      %v805 = vpack.c.bf16 %v786, %v785
      %v806 = vpack.c.bf16 %v788, %v787
      %v807 = vpack.c.bf16 %v790, %v789
      %v808 = vpack.c.bf16 %v792, %v791
      %v809 = vld [vmem:[%s3] sm:$0xf]
      %v810 = vld [vmem:[%s3 + $0x4] sm:$0xf]
      %v811 = vld [vmem:[%s3 + $0x8] sm:$0xf]
      %v812 = vld [vmem:[%s3 + $0xc] sm:$0xf]
      %v813 = vld [vmem:[%s3 + $0x10] sm:$0xf]
      %v814 = vld [vmem:[%s3 + $0x14] sm:$0xf]
      %v815 = vld [vmem:[%s3 + $0x18] sm:$0xf]
      %v816 = vld [vmem:[%s3 + $0x1c] sm:$0xf]
      %v817 = vld [vmem:[%s3 + $0x20] sm:$0xf]
      %v818 = vld [vmem:[%s3 + $0x24] sm:$0xf]
      %v819 = vld [vmem:[%s3 + $0x28] sm:$0xf]
      %v820 = vld [vmem:[%s3 + $0x2c] sm:$0xf]
      %v821 = vld [vmem:[%s3 + $0x30] sm:$0xf]
      %v822 = vld [vmem:[%s3 + $0x34] sm:$0xf]
      %v823 = vld [vmem:[%s3 + $0x38] sm:$0xf]
      %v824 = vld [vmem:[%s3 + $0x3c] sm:$0xf]
      %v825 = vld [vmem:[%s4] sm:$0x1]
      %v827 = vlaneseq
      %v828 = vshrl.u32 %v827, 7
      %v829 = vsub.s32 0, %v828
      %v830 = vrot.slane %v825, %v829
      %v848 = vunpack.c.l.b16 %v809
      %v849 = vunpack.c.l.b16 %v810
      %v850 = vunpack.c.l.b16 %v811
      %v851 = vunpack.c.l.b16 %v812
      %v852 = vunpack.c.l.b16 %v813
      %v853 = vunpack.c.l.b16 %v814
      %v854 = vunpack.c.l.b16 %v815
      %v855 = vunpack.c.l.b16 %v816
      %v856 = vunpack.c.l.b16 %v817
      %v857 = vunpack.c.l.b16 %v818
      %v858 = vunpack.c.l.b16 %v819
      %v859 = vunpack.c.l.b16 %v820
      %v860 = vunpack.c.l.b16 %v821
      %v861 = vunpack.c.l.b16 %v822
      %v862 = vunpack.c.l.b16 %v823
      %v863 = vunpack.c.l.b16 %v824
      %v864 = vpack.c.b16 %v849, %v848
      %v865 = vpack.c.b16 %v851, %v850
      %v866 = vpack.c.b16 %v853, %v852
      %v867 = vpack.c.b16 %v855, %v854
      %v868 = vpack.c.b16 %v857, %v856
      %v869 = vpack.c.b16 %v859, %v858
      %v870 = vpack.c.b16 %v861, %v860
      %v871 = vpack.c.b16 %v863, %v862
      %880 = vmatprep.subr.bf16.mxu0 0
      %881 = vmatpush1.bf16.msra.mxu0 %v871
      %882 = vmatprep.subr.bf16.mxu0 0
      %883 = vmatpush1.bf16.msra.mxu0 %v870
      %884 = vmatprep.subr.bf16.mxu0 0
      %885 = vmatpush1.bf16.msra.mxu0 %v869
      %886 = vmatprep.subr.bf16.mxu0 0
      %887 = vmatpush1.bf16.msra.mxu0 %v868
      %888 = vmatprep.subr.bf16.mxu0 0
      %889 = vmatpush1.bf16.msra.mxu0 %v867
      %890 = vmatprep.subr.bf16.mxu0 0
      %891 = vmatpush1.bf16.msra.mxu0 %v866
      %892 = vmatprep.subr.bf16.mxu0 0
      %893 = vmatpush1.bf16.msra.mxu0 %v865
      %894 = vmatprep.subr.bf16.mxu0 0
      %895 = vmatpush1.bf16.msra.mxu0 %v864
      %896 = vmatprep.subr.bf16.mxu0 0
      %897 = vmatpush2.bf16.msra.mxu0 0
      %898 = vmatprep.subr.bf16.mxu0 0
      %899 = vmatpush2.bf16.msra.mxu0 0
      %900 = vmatprep.subr.bf16.mxu0 0
      %901 = vmatpush2.bf16.msra.mxu0 0
      %902 = vmatprep.subr.bf16.mxu0 0
      %903 = vmatpush2.bf16.msra.mxu0 0
      %904 = vmatprep.subr.bf16.mxu0 0
      %905 = vmatpush2.bf16.msra.mxu0 0
      %906 = vmatprep.subr.bf16.mxu0 0
      %907 = vmatpush2.bf16.msra.mxu0 0
      %908 = vmatprep.subr.bf16.mxu0 0
      %909 = vmatpush2.bf16.msra.mxu0 0
      %910 = vmatprep.subr.bf16.mxu0 0
      %911 = vmatpush2.bf16.msra.mxu0 0
      %912 = vmatprep.mubr.bf16.mxu0 0
      %913 = vmatmul.mubr.bf16.gmra.mxu0 %v793
      %v914 = vpop.f32.mrf.mxu0
      %v915 = vadd.f32 %v830, %v914
      %v916 = vpop.f32.mrf.mxu0
      %v917 = vpop.f32.mrf.mxu0
      %v918 = vadd.f32 %v830, %v917
      %v919 = vpop.f32.mrf.mxu0
      %920 = vmatprep.mubr.bf16.mxu0 0
      %921 = vmatmul.mubr.bf16.gmra.mxu0 %v794
      %v922 = vpop.f32.mrf.mxu0
      %v923 = vadd.f32 %v830, %v922
      %v924 = vpop.f32.mrf.mxu0
      %v925 = vpop.f32.mrf.mxu0
      %v926 = vadd.f32 %v830, %v925
      %v927 = vpop.f32.mrf.mxu0
      %928 = vmatprep.mubr.bf16.mxu0 0
      %929 = vmatmul.mubr.bf16.gmra.mxu0 %v795
      %v930 = vpop.f32.mrf.mxu0
      %v931 = vadd.f32 %v830, %v930
      %v932 = vpop.f32.mrf.mxu0
      %v933 = vpop.f32.mrf.mxu0
      %v934 = vadd.f32 %v830, %v933
      %v935 = vpop.f32.mrf.mxu0
      %936 = vmatprep.mubr.bf16.mxu0 0
      %937 = vmatmul.mubr.bf16.gmra.mxu0 %v796
      %v938 = vpop.f32.mrf.mxu0
      %v939 = vadd.f32 %v830, %v938
      %v940 = vpop.f32.mrf.mxu0
      %v941 = vpop.f32.mrf.mxu0
      %v942 = vadd.f32 %v830, %v941
      %v943 = vpop.f32.mrf.mxu0
      %944 = vmatprep.mubr.bf16.mxu0 0
      %945 = vmatmul.mubr.bf16.gmra.mxu0 %v797
      %v946 = vpop.f32.mrf.mxu0
      %v947 = vadd.f32 %v830, %v946
      %v948 = vpop.f32.mrf.mxu0
      %v949 = vpop.f32.mrf.mxu0
      %v950 = vadd.f32 %v830, %v949
      %v951 = vpop.f32.mrf.mxu0
      %952 = vmatprep.mubr.bf16.mxu0 0
      %953 = vmatmul.mubr.bf16.gmra.mxu0 %v798
      %v954 = vpop.f32.mrf.mxu0
      %v955 = vadd.f32 %v830, %v954
      %v956 = vpop.f32.mrf.mxu0
      %v957 = vpop.f32.mrf.mxu0
      %v958 = vadd.f32 %v830, %v957
      %v959 = vpop.f32.mrf.mxu0
      %960 = vmatprep.mubr.bf16.mxu0 0
      %961 = vmatmul.mubr.bf16.gmra.mxu0 %v799
      %v962 = vpop.f32.mrf.mxu0
      %v963 = vadd.f32 %v830, %v962
      %v964 = vpop.f32.mrf.mxu0
      %v965 = vpop.f32.mrf.mxu0
      %v966 = vadd.f32 %v830, %v965
      %v967 = vpop.f32.mrf.mxu0
      %968 = vmatprep.mubr.bf16.mxu0 0
      %969 = vmatmul.mubr.bf16.gmra.mxu0 %v800
      %v970 = vpop.f32.mrf.mxu0
      %v971 = vadd.f32 %v830, %v970
      %v972 = vpop.f32.mrf.mxu0
      %v973 = vpop.f32.mrf.mxu0
      %v974 = vadd.f32 %v830, %v973
      %v975 = vpop.f32.mrf.mxu0
      %976 = vmatprep.mubr.bf16.mxu0 0
      %977 = vmatmul.mubr.bf16.gmra.mxu0 %v801
      %v978 = vpop.f32.mrf.mxu0
      %v979 = vadd.f32 %v830, %v978
      %v980 = vpop.f32.mrf.mxu0
      %v981 = vpop.f32.mrf.mxu0
      %v982 = vadd.f32 %v830, %v981
      %v983 = vpop.f32.mrf.mxu0
      %984 = vmatprep.mubr.bf16.mxu0 0
      %985 = vmatmul.mubr.bf16.gmra.mxu0 %v802
      %v986 = vpop.f32.mrf.mxu0
      %v987 = vadd.f32 %v830, %v986
      %v988 = vpop.f32.mrf.mxu0
      %v989 = vpop.f32.mrf.mxu0
      %v990 = vadd.f32 %v830, %v989
      %v991 = vpop.f32.mrf.mxu0
      %992 = vmatprep.mubr.bf16.mxu0 0
      %993 = vmatmul.mubr.bf16.gmra.mxu0 %v803
      %v994 = vpop.f32.mrf.mxu0
      %v995 = vadd.f32 %v830, %v994
      %v996 = vpop.f32.mrf.mxu0
      %v997 = vpop.f32.mrf.mxu0
      %v998 = vadd.f32 %v830, %v997
      %v999 = vpop.f32.mrf.mxu0
      %1000 = vmatprep.mubr.bf16.mxu0 0
      %1001 = vmatmul.mubr.bf16.gmra.mxu0 %v804
      %v1002 = vpop.f32.mrf.mxu0
      %v1003 = vadd.f32 %v830, %v1002
      %v1004 = vpop.f32.mrf.mxu0
      %v1005 = vpop.f32.mrf.mxu0
      %v1006 = vadd.f32 %v830, %v1005
      %v1007 = vpop.f32.mrf.mxu0
      %1008 = vmatprep.mubr.bf16.mxu0 0
      %1009 = vmatmul.mubr.bf16.gmra.mxu0 %v805
      %v1010 = vpop.f32.mrf.mxu0
      %v1011 = vadd.f32 %v830, %v1010
      %v1012 = vpop.f32.mrf.mxu0
      %v1013 = vpop.f32.mrf.mxu0
      %v1014 = vadd.f32 %v830, %v1013
      %v1015 = vpop.f32.mrf.mxu0
      %1016 = vmatprep.mubr.bf16.mxu0 0
      %1017 = vmatmul.mubr.bf16.gmra.mxu0 %v806
      %v1018 = vpop.f32.mrf.mxu0
      %v1019 = vadd.f32 %v830, %v1018
      %v1020 = vpop.f32.mrf.mxu0
      %v1021 = vpop.f32.mrf.mxu0
      %v1022 = vadd.f32 %v830, %v1021
      %v1023 = vpop.f32.mrf.mxu0
      %1024 = vmatprep.mubr.bf16.mxu0 0
      %1025 = vmatmul.mubr.bf16.gmra.mxu0 %v807
      %v1026 = vpop.f32.mrf.mxu0
      %v1027 = vadd.f32 %v830, %v1026
      %v1028 = vpop.f32.mrf.mxu0
      %v1029 = vpop.f32.mrf.mxu0
      %v1030 = vadd.f32 %v830, %v1029
      %v1031 = vpop.f32.mrf.mxu0
      %1032 = vmatprep.mubr.bf16.mxu0 0
      %1033 = vmatmul.mubr.bf16.gmra.mxu0 %v808
      %v1034 = vpop.f32.mrf.mxu0
      %v1035 = vadd.f32 %v830, %v1034
      %v1036 = vpop.f32.mrf.mxu0
      %v1037 = vpop.f32.mrf.mxu0
      %v1038 = vadd.f32 %v830, %v1037
      %v1039 = vpop.f32.mrf.mxu0
      %1040 = vdwg.mxu0
      %vm1041 = vcmp.gt.f32.partialorder %v915, 0.0
      %vm1042 = vcmp.gt.f32.partialorder %v918, 0.0
      %vm1043 = vcmp.gt.f32.partialorder %v923, 0.0
      %vm1044 = vcmp.gt.f32.partialorder %v926, 0.0
      %vm1045 = vcmp.gt.f32.partialorder %v931, 0.0
      %vm1046 = vcmp.gt.f32.partialorder %v934, 0.0
      %vm1047 = vcmp.gt.f32.partialorder %v939, 0.0
      %vm1048 = vcmp.gt.f32.partialorder %v942, 0.0
      %vm1049 = vcmp.gt.f32.partialorder %v947, 0.0
      %vm1050 = vcmp.gt.f32.partialorder %v950, 0.0
      %vm1051 = vcmp.gt.f32.partialorder %v955, 0.0
      %vm1052 = vcmp.gt.f32.partialorder %v958, 0.0
      %vm1053 = vcmp.gt.f32.partialorder %v963, 0.0
      %vm1054 = vcmp.gt.f32.partialorder %v966, 0.0
      %vm1055 = vcmp.gt.f32.partialorder %v971, 0.0
      %vm1056 = vcmp.gt.f32.partialorder %v974, 0.0
      %vm1057 = vcmp.gt.f32.partialorder %v979, 0.0
      %vm1058 = vcmp.gt.f32.partialorder %v982, 0.0
      %vm1059 = vcmp.gt.f32.partialorder %v987, 0.0
      %vm1060 = vcmp.gt.f32.partialorder %v990, 0.0
      %vm1061 = vcmp.gt.f32.partialorder %v995, 0.0
      %vm1062 = vcmp.gt.f32.partialorder %v998, 0.0
      %vm1063 = vcmp.gt.f32.partialorder %v1003, 0.0
      %vm1064 = vcmp.gt.f32.partialorder %v1006, 0.0
      %vm1065 = vcmp.gt.f32.partialorder %v1011, 0.0
      %vm1066 = vcmp.gt.f32.partialorder %v1014, 0.0
      %vm1067 = vcmp.gt.f32.partialorder %v1019, 0.0
      %vm1068 = vcmp.gt.f32.partialorder %v1022, 0.0
      %vm1069 = vcmp.gt.f32.partialorder %v1027, 0.0
      %vm1070 = vcmp.gt.f32.partialorder %v1030, 0.0
      %vm1071 = vcmp.gt.f32.partialorder %v1035, 0.0
      %vm1072 = vcmp.gt.f32.partialorder %v1038, 0.0
      %v1073 = vmul.f32 %v915, 0.01
      %v1074 = vmul.f32 %v918, 0.01
      %v1075 = vmul.f32 %v923, 0.01
      %v1076 = vmul.f32 %v926, 0.01
      %v1077 = vmul.f32 %v931, 0.01
      %v1078 = vmul.f32 %v934, 0.01
      %v1079 = vmul.f32 %v939, 0.01
      %v1080 = vmul.f32 %v942, 0.01
      %v1081 = vmul.f32 %v947, 0.01
      %v1082 = vmul.f32 %v950, 0.01
      %v1083 = vmul.f32 %v955, 0.01
      %v1084 = vmul.f32 %v958, 0.01
      %v1085 = vmul.f32 %v963, 0.01
      %v1086 = vmul.f32 %v966, 0.01
      %v1087 = vmul.f32 %v971, 0.01
      %v1088 = vmul.f32 %v974, 0.01
      %v1089 = vmul.f32 %v979, 0.01
      %v1090 = vmul.f32 %v982, 0.01
      %v1091 = vmul.f32 %v987, 0.01
      %v1092 = vmul.f32 %v990, 0.01
      %v1093 = vmul.f32 %v995, 0.01
      %v1094 = vmul.f32 %v998, 0.01
      %v1095 = vmul.f32 %v1003, 0.01
      %v1096 = vmul.f32 %v1006, 0.01
      %v1097 = vmul.f32 %v1011, 0.01
      %v1098 = vmul.f32 %v1014, 0.01
      %v1099 = vmul.f32 %v1019, 0.01
      %v1100 = vmul.f32 %v1022, 0.01
      %v1101 = vmul.f32 %v1027, 0.01
      %v1102 = vmul.f32 %v1030, 0.01
      %v1103 = vmul.f32 %v1035, 0.01
      %v1104 = vmul.f32 %v1038, 0.01
      %v1105 = vsel %vm1041, %v915, %v1073
      %v1106 = vsel %vm1042, %v918, %v1074
      %v1107 = vsel %vm1043, %v923, %v1075
      %v1108 = vsel %vm1044, %v926, %v1076
      %v1109 = vsel %vm1045, %v931, %v1077
      %v1110 = vsel %vm1046, %v934, %v1078
      %v1111 = vsel %vm1047, %v939, %v1079
      %v1112 = vsel %vm1048, %v942, %v1080
      %v1113 = vsel %vm1049, %v947, %v1081
      %v1114 = vsel %vm1050, %v950, %v1082
      %v1115 = vsel %vm1051, %v955, %v1083
      %v1116 = vsel %vm1052, %v958, %v1084
      %v1117 = vsel %vm1053, %v963, %v1085
      %v1118 = vsel %vm1054, %v966, %v1086
      %v1119 = vsel %vm1055, %v971, %v1087
      %v1120 = vsel %vm1056, %v974, %v1088
      %v1121 = vsel %vm1057, %v979, %v1089
      %v1122 = vsel %vm1058, %v982, %v1090
      %v1123 = vsel %vm1059, %v987, %v1091
      %v1124 = vsel %vm1060, %v990, %v1092
      %v1125 = vsel %vm1061, %v995, %v1093
      %v1126 = vsel %vm1062, %v998, %v1094
      %v1127 = vsel %vm1063, %v1003, %v1095
      %v1128 = vsel %vm1064, %v1006, %v1096
      %v1129 = vsel %vm1065, %v1011, %v1097
      %v1130 = vsel %vm1066, %v1014, %v1098
      %v1131 = vsel %vm1067, %v1019, %v1099
      %v1132 = vsel %vm1068, %v1022, %v1100
      %v1133 = vsel %vm1069, %v1027, %v1101
      %v1134 = vsel %vm1070, %v1030, %v1102
      %v1135 = vsel %vm1071, %v1035, %v1103
      %v1136 = vsel %vm1072, %v1038, %v1104
      %v1137 = vpack.c.bf16 %v1106, %v1105
      %v1138 = vpack.c.bf16 %v1108, %v1107
      %v1139 = vpack.c.bf16 %v1110, %v1109
      %v1140 = vpack.c.bf16 %v1112, %v1111
      %v1141 = vpack.c.bf16 %v1114, %v1113
      %v1142 = vpack.c.bf16 %v1116, %v1115
      %v1143 = vpack.c.bf16 %v1118, %v1117
      %v1144 = vpack.c.bf16 %v1120, %v1119
      %v1145 = vpack.c.bf16 %v1122, %v1121
      %v1146 = vpack.c.bf16 %v1124, %v1123
      %v1147 = vpack.c.bf16 %v1126, %v1125
      %v1148 = vpack.c.bf16 %v1128, %v1127
      %v1149 = vpack.c.bf16 %v1130, %v1129
      %v1150 = vpack.c.bf16 %v1132, %v1131
      %v1151 = vpack.c.bf16 %v1134, %v1133
      %v1152 = vpack.c.bf16 %v1136, %v1135
      %v1153 = vld [vmem:[%s5] sm:$0xf]
      %v1154 = vld [vmem:[%s5 + $0x4] sm:$0xf]
      %v1155 = vld [vmem:[%s5 + $0x8] sm:$0xf]
      %v1156 = vld [vmem:[%s5 + $0xc] sm:$0xf]
      %v1157 = vld [vmem:[%s5 + $0x10] sm:$0xf]
      %v1158 = vld [vmem:[%s5 + $0x14] sm:$0xf]
      %v1159 = vld [vmem:[%s5 + $0x18] sm:$0xf]
      %v1160 = vld [vmem:[%s5 + $0x1c] sm:$0xf]
      %v1161 = vld [vmem:[%s5 + $0x20] sm:$0xf]
      %v1162 = vld [vmem:[%s5 + $0x24] sm:$0xf]
      %v1163 = vld [vmem:[%s5 + $0x28] sm:$0xf]
      %v1164 = vld [vmem:[%s5 + $0x2c] sm:$0xf]
      %v1165 = vld [vmem:[%s5 + $0x30] sm:$0xf]
      %v1166 = vld [vmem:[%s5 + $0x34] sm:$0xf]
      %v1167 = vld [vmem:[%s5 + $0x38] sm:$0xf]
      %v1168 = vld [vmem:[%s5 + $0x3c] sm:$0xf]
      %v1169 = vld [vmem:[%s6] sm:$0x1]
      %v1171 = vlaneseq
      %v1172 = vshrl.u32 %v1171, 7
      %v1173 = vsub.s32 0, %v1172
      %v1174 = vrot.slane %v1169, %v1173
      %v1192 = vunpack.c.l.b16 %v1153
      %v1193 = vunpack.c.l.b16 %v1154
      %v1194 = vunpack.c.l.b16 %v1155
      %v1195 = vunpack.c.l.b16 %v1156
      %v1196 = vunpack.c.l.b16 %v1157
      %v1197 = vunpack.c.l.b16 %v1158
      %v1198 = vunpack.c.l.b16 %v1159
      %v1199 = vunpack.c.l.b16 %v1160
      %v1200 = vunpack.c.l.b16 %v1161
      %v1201 = vunpack.c.l.b16 %v1162
      %v1202 = vunpack.c.l.b16 %v1163
      %v1203 = vunpack.c.l.b16 %v1164
      %v1204 = vunpack.c.l.b16 %v1165
      %v1205 = vunpack.c.l.b16 %v1166
      %v1206 = vunpack.c.l.b16 %v1167
      %v1207 = vunpack.c.l.b16 %v1168
      %v1208 = vpack.c.b16 %v1193, %v1192
      %v1209 = vpack.c.b16 %v1195, %v1194
      %v1210 = vpack.c.b16 %v1197, %v1196
      %v1211 = vpack.c.b16 %v1199, %v1198
      %v1212 = vpack.c.b16 %v1201, %v1200
      %v1213 = vpack.c.b16 %v1203, %v1202
      %v1214 = vpack.c.b16 %v1205, %v1204
      %v1215 = vpack.c.b16 %v1207, %v1206
      %1224 = vmatprep.subr.bf16.mxu0 0
      %1225 = vmatpush1.bf16.msra.mxu0 %v1215
      %1226 = vmatprep.subr.bf16.mxu0 0
      %1227 = vmatpush1.bf16.msra.mxu0 %v1214
      %1228 = vmatprep.subr.bf16.mxu0 0
      %1229 = vmatpush1.bf16.msra.mxu0 %v1213
      %1230 = vmatprep.subr.bf16.mxu0 0
      %1231 = vmatpush1.bf16.msra.mxu0 %v1212
      %1232 = vmatprep.subr.bf16.mxu0 0
      %1233 = vmatpush1.bf16.msra.mxu0 %v1211
      %1234 = vmatprep.subr.bf16.mxu0 0
      %1235 = vmatpush1.bf16.msra.mxu0 %v1210
      %1236 = vmatprep.subr.bf16.mxu0 0
      %1237 = vmatpush1.bf16.msra.mxu0 %v1209
      %1238 = vmatprep.subr.bf16.mxu0 0
      %1239 = vmatpush1.bf16.msra.mxu0 %v1208
      %1240 = vmatprep.subr.bf16.mxu0 0
      %1241 = vmatpush2.bf16.msra.mxu0 0
      %1242 = vmatprep.subr.bf16.mxu0 0
      %1243 = vmatpush2.bf16.msra.mxu0 0
      %1244 = vmatprep.subr.bf16.mxu0 0
      %1245 = vmatpush2.bf16.msra.mxu0 0
      %1246 = vmatprep.subr.bf16.mxu0 0
      %1247 = vmatpush2.bf16.msra.mxu0 0
      %1248 = vmatprep.subr.bf16.mxu0 0
      %1249 = vmatpush2.bf16.msra.mxu0 0
      %1250 = vmatprep.subr.bf16.mxu0 0
      %1251 = vmatpush2.bf16.msra.mxu0 0
      %1252 = vmatprep.subr.bf16.mxu0 0
      %1253 = vmatpush2.bf16.msra.mxu0 0
      %1254 = vmatprep.subr.bf16.mxu0 0
      %1255 = vmatpush2.bf16.msra.mxu0 0
      %1256 = vmatprep.mubr.bf16.mxu0 0
      %1257 = vmatmul.mubr.bf16.gmra.mxu0 %v1137
      %v1258 = vpop.f32.mrf.mxu0
      %v1259 = vadd.f32 %v1174, %v1258
      %v1260 = vpop.f32.mrf.mxu0
      %v1261 = vpop.f32.mrf.mxu0
      %v1262 = vadd.f32 %v1174, %v1261
      %v1263 = vpop.f32.mrf.mxu0
      %1264 = vmatprep.mubr.bf16.mxu0 0
      %1265 = vmatmul.mubr.bf16.gmra.mxu0 %v1138
      %v1266 = vpop.f32.mrf.mxu0
      %v1267 = vadd.f32 %v1174, %v1266
      %v1268 = vpop.f32.mrf.mxu0
      %v1269 = vpop.f32.mrf.mxu0
      %v1270 = vadd.f32 %v1174, %v1269
      %v1271 = vpop.f32.mrf.mxu0
      %1272 = vmatprep.mubr.bf16.mxu0 0
      %1273 = vmatmul.mubr.bf16.gmra.mxu0 %v1139
      %v1274 = vpop.f32.mrf.mxu0
      %v1275 = vadd.f32 %v1174, %v1274
      %v1276 = vpop.f32.mrf.mxu0
      %v1277 = vpop.f32.mrf.mxu0
      %v1278 = vadd.f32 %v1174, %v1277
      %v1279 = vpop.f32.mrf.mxu0
      %1280 = vmatprep.mubr.bf16.mxu0 0
      %1281 = vmatmul.mubr.bf16.gmra.mxu0 %v1140
      %v1282 = vpop.f32.mrf.mxu0
      %v1283 = vadd.f32 %v1174, %v1282
      %v1284 = vpop.f32.mrf.mxu0
      %v1285 = vpop.f32.mrf.mxu0
      %v1286 = vadd.f32 %v1174, %v1285
      %v1287 = vpop.f32.mrf.mxu0
      %1288 = vmatprep.mubr.bf16.mxu0 0
      %1289 = vmatmul.mubr.bf16.gmra.mxu0 %v1141
      %v1290 = vpop.f32.mrf.mxu0
      %v1291 = vadd.f32 %v1174, %v1290
      %v1292 = vpop.f32.mrf.mxu0
      %v1293 = vpop.f32.mrf.mxu0
      %v1294 = vadd.f32 %v1174, %v1293
      %v1295 = vpop.f32.mrf.mxu0
      %1296 = vmatprep.mubr.bf16.mxu0 0
      %1297 = vmatmul.mubr.bf16.gmra.mxu0 %v1142
      %v1298 = vpop.f32.mrf.mxu0
      %v1299 = vadd.f32 %v1174, %v1298
      %v1300 = vpop.f32.mrf.mxu0
      %v1301 = vpop.f32.mrf.mxu0
      %v1302 = vadd.f32 %v1174, %v1301
      %v1303 = vpop.f32.mrf.mxu0
      %1304 = vmatprep.mubr.bf16.mxu0 0
      %1305 = vmatmul.mubr.bf16.gmra.mxu0 %v1143
      %v1306 = vpop.f32.mrf.mxu0
      %v1307 = vadd.f32 %v1174, %v1306
      %v1308 = vpop.f32.mrf.mxu0
      %v1309 = vpop.f32.mrf.mxu0
      %v1310 = vadd.f32 %v1174, %v1309
      %v1311 = vpop.f32.mrf.mxu0
      %1312 = vmatprep.mubr.bf16.mxu0 0
      %1313 = vmatmul.mubr.bf16.gmra.mxu0 %v1144
      %v1314 = vpop.f32.mrf.mxu0
      %v1315 = vadd.f32 %v1174, %v1314
      %v1316 = vpop.f32.mrf.mxu0
      %v1317 = vpop.f32.mrf.mxu0
      %v1318 = vadd.f32 %v1174, %v1317
      %v1319 = vpop.f32.mrf.mxu0
      %1320 = vmatprep.mubr.bf16.mxu0 0
      %1321 = vmatmul.mubr.bf16.gmra.mxu0 %v1145
      %v1322 = vpop.f32.mrf.mxu0
      %v1323 = vadd.f32 %v1174, %v1322
      %v1324 = vpop.f32.mrf.mxu0
      %v1325 = vpop.f32.mrf.mxu0
      %v1326 = vadd.f32 %v1174, %v1325
      %v1327 = vpop.f32.mrf.mxu0
      %1328 = vmatprep.mubr.bf16.mxu0 0
      %1329 = vmatmul.mubr.bf16.gmra.mxu0 %v1146
      %v1330 = vpop.f32.mrf.mxu0
      %v1331 = vadd.f32 %v1174, %v1330
      %v1332 = vpop.f32.mrf.mxu0
      %v1333 = vpop.f32.mrf.mxu0
      %v1334 = vadd.f32 %v1174, %v1333
      %v1335 = vpop.f32.mrf.mxu0
      %1336 = vmatprep.mubr.bf16.mxu0 0
      %1337 = vmatmul.mubr.bf16.gmra.mxu0 %v1147
      %v1338 = vpop.f32.mrf.mxu0
      %v1339 = vadd.f32 %v1174, %v1338
      %v1340 = vpop.f32.mrf.mxu0
      %v1341 = vpop.f32.mrf.mxu0
      %v1342 = vadd.f32 %v1174, %v1341
      %v1343 = vpop.f32.mrf.mxu0
      %1344 = vmatprep.mubr.bf16.mxu0 0
      %1345 = vmatmul.mubr.bf16.gmra.mxu0 %v1148
      %v1346 = vpop.f32.mrf.mxu0
      %v1347 = vadd.f32 %v1174, %v1346
      %v1348 = vpop.f32.mrf.mxu0
      %v1349 = vpop.f32.mrf.mxu0
      %v1350 = vadd.f32 %v1174, %v1349
      %v1351 = vpop.f32.mrf.mxu0
      %1352 = vmatprep.mubr.bf16.mxu0 0
      %1353 = vmatmul.mubr.bf16.gmra.mxu0 %v1149
      %v1354 = vpop.f32.mrf.mxu0
      %v1355 = vadd.f32 %v1174, %v1354
      %v1356 = vpop.f32.mrf.mxu0
      %v1357 = vpop.f32.mrf.mxu0
      %v1358 = vadd.f32 %v1174, %v1357
      %v1359 = vpop.f32.mrf.mxu0
      %1360 = vmatprep.mubr.bf16.mxu0 0
      %1361 = vmatmul.mubr.bf16.gmra.mxu0 %v1150
      %v1362 = vpop.f32.mrf.mxu0
      %v1363 = vadd.f32 %v1174, %v1362
      %v1364 = vpop.f32.mrf.mxu0
      %v1365 = vpop.f32.mrf.mxu0
      %v1366 = vadd.f32 %v1174, %v1365
      %v1367 = vpop.f32.mrf.mxu0
      %1368 = vmatprep.mubr.bf16.mxu0 0
      %1369 = vmatmul.mubr.bf16.gmra.mxu0 %v1151
      %v1370 = vpop.f32.mrf.mxu0
      %v1371 = vadd.f32 %v1174, %v1370
      %v1372 = vpop.f32.mrf.mxu0
      %v1373 = vpop.f32.mrf.mxu0
      %v1374 = vadd.f32 %v1174, %v1373
      %v1375 = vpop.f32.mrf.mxu0
      %1376 = vmatprep.mubr.bf16.mxu0 0
      %1377 = vmatmul.mubr.bf16.gmra.mxu0 %v1152
      %v1378 = vpop.f32.mrf.mxu0
      %v1379 = vadd.f32 %v1174, %v1378
      %v1380 = vpop.f32.mrf.mxu0
      %v1381 = vpop.f32.mrf.mxu0
      %v1382 = vadd.f32 %v1174, %v1381
      %v1383 = vpop.f32.mrf.mxu0
      %1384 = vdwg.mxu0
      %vm1385 = vcmp.gt.f32.partialorder %v1259, 0.0
      %vm1386 = vcmp.gt.f32.partialorder %v1262, 0.0
      %vm1387 = vcmp.gt.f32.partialorder %v1267, 0.0
      %vm1388 = vcmp.gt.f32.partialorder %v1270, 0.0
      %vm1389 = vcmp.gt.f32.partialorder %v1275, 0.0
      %vm1390 = vcmp.gt.f32.partialorder %v1278, 0.0
      %vm1391 = vcmp.gt.f32.partialorder %v1283, 0.0
      %vm1392 = vcmp.gt.f32.partialorder %v1286, 0.0
      %vm1393 = vcmp.gt.f32.partialorder %v1291, 0.0
      %vm1394 = vcmp.gt.f32.partialorder %v1294, 0.0
      %vm1395 = vcmp.gt.f32.partialorder %v1299, 0.0
      %vm1396 = vcmp.gt.f32.partialorder %v1302, 0.0
      %vm1397 = vcmp.gt.f32.partialorder %v1307, 0.0
      %vm1398 = vcmp.gt.f32.partialorder %v1310, 0.0
      %vm1399 = vcmp.gt.f32.partialorder %v1315, 0.0
      %vm1400 = vcmp.gt.f32.partialorder %v1318, 0.0
      %vm1401 = vcmp.gt.f32.partialorder %v1323, 0.0
      %vm1402 = vcmp.gt.f32.partialorder %v1326, 0.0
      %vm1403 = vcmp.gt.f32.partialorder %v1331, 0.0
      %vm1404 = vcmp.gt.f32.partialorder %v1334, 0.0
      %vm1405 = vcmp.gt.f32.partialorder %v1339, 0.0
      %vm1406 = vcmp.gt.f32.partialorder %v1342, 0.0
      %vm1407 = vcmp.gt.f32.partialorder %v1347, 0.0
      %vm1408 = vcmp.gt.f32.partialorder %v1350, 0.0
      %vm1409 = vcmp.gt.f32.partialorder %v1355, 0.0
      %vm1410 = vcmp.gt.f32.partialorder %v1358, 0.0
      %vm1411 = vcmp.gt.f32.partialorder %v1363, 0.0
      %vm1412 = vcmp.gt.f32.partialorder %v1366, 0.0
      %vm1413 = vcmp.gt.f32.partialorder %v1371, 0.0
      %vm1414 = vcmp.gt.f32.partialorder %v1374, 0.0
      %vm1415 = vcmp.gt.f32.partialorder %v1379, 0.0
      %vm1416 = vcmp.gt.f32.partialorder %v1382, 0.0
      %v1417 = vmul.f32 %v1259, 0.01
      %v1418 = vmul.f32 %v1262, 0.01
      %v1419 = vmul.f32 %v1267, 0.01
      %v1420 = vmul.f32 %v1270, 0.01
      %v1421 = vmul.f32 %v1275, 0.01
      %v1422 = vmul.f32 %v1278, 0.01
      %v1423 = vmul.f32 %v1283, 0.01
      %v1424 = vmul.f32 %v1286, 0.01
      %v1425 = vmul.f32 %v1291, 0.01
      %v1426 = vmul.f32 %v1294, 0.01
      %v1427 = vmul.f32 %v1299, 0.01
      %v1428 = vmul.f32 %v1302, 0.01
      %v1429 = vmul.f32 %v1307, 0.01
      %v1430 = vmul.f32 %v1310, 0.01
      %v1431 = vmul.f32 %v1315, 0.01
      %v1432 = vmul.f32 %v1318, 0.01
      %v1433 = vmul.f32 %v1323, 0.01
      %v1434 = vmul.f32 %v1326, 0.01
      %v1435 = vmul.f32 %v1331, 0.01
      %v1436 = vmul.f32 %v1334, 0.01
      %v1437 = vmul.f32 %v1339, 0.01
      %v1438 = vmul.f32 %v1342, 0.01
      %v1439 = vmul.f32 %v1347, 0.01
      %v1440 = vmul.f32 %v1350, 0.01
      %v1441 = vmul.f32 %v1355, 0.01
      %v1442 = vmul.f32 %v1358, 0.01
      %v1443 = vmul.f32 %v1363, 0.01
      %v1444 = vmul.f32 %v1366, 0.01
      %v1445 = vmul.f32 %v1371, 0.01
      %v1446 = vmul.f32 %v1374, 0.01
      %v1447 = vmul.f32 %v1379, 0.01
      %v1448 = vmul.f32 %v1382, 0.01
      %v1449 = vsel %vm1385, %v1259, %v1417
      %v1450 = vsel %vm1386, %v1262, %v1418
      %v1451 = vsel %vm1387, %v1267, %v1419
      %v1452 = vsel %vm1388, %v1270, %v1420
      %v1453 = vsel %vm1389, %v1275, %v1421
      %v1454 = vsel %vm1390, %v1278, %v1422
      %v1455 = vsel %vm1391, %v1283, %v1423
      %v1456 = vsel %vm1392, %v1286, %v1424
      %v1457 = vsel %vm1393, %v1291, %v1425
      %v1458 = vsel %vm1394, %v1294, %v1426
      %v1459 = vsel %vm1395, %v1299, %v1427
      %v1460 = vsel %vm1396, %v1302, %v1428
      %v1461 = vsel %vm1397, %v1307, %v1429
      %v1462 = vsel %vm1398, %v1310, %v1430
      %v1463 = vsel %vm1399, %v1315, %v1431
      %v1464 = vsel %vm1400, %v1318, %v1432
      %v1465 = vsel %vm1401, %v1323, %v1433
      %v1466 = vsel %vm1402, %v1326, %v1434
      %v1467 = vsel %vm1403, %v1331, %v1435
      %v1468 = vsel %vm1404, %v1334, %v1436
      %v1469 = vsel %vm1405, %v1339, %v1437
      %v1470 = vsel %vm1406, %v1342, %v1438
      %v1471 = vsel %vm1407, %v1347, %v1439
      %v1472 = vsel %vm1408, %v1350, %v1440
      %v1473 = vsel %vm1409, %v1355, %v1441
      %v1474 = vsel %vm1410, %v1358, %v1442
      %v1475 = vsel %vm1411, %v1363, %v1443
      %v1476 = vsel %vm1412, %v1366, %v1444
      %v1477 = vsel %vm1413, %v1371, %v1445
      %v1478 = vsel %vm1414, %v1374, %v1446
      %v1479 = vsel %vm1415, %v1379, %v1447
      %v1480 = vsel %vm1416, %v1382, %v1448
      %v1481 = vpack.c.bf16 %v1450, %v1449
      %v1482 = vpack.c.bf16 %v1452, %v1451
      %v1483 = vpack.c.bf16 %v1454, %v1453
      %v1484 = vpack.c.bf16 %v1456, %v1455
      %v1485 = vpack.c.bf16 %v1458, %v1457
      %v1486 = vpack.c.bf16 %v1460, %v1459
      %v1487 = vpack.c.bf16 %v1462, %v1461
      %v1488 = vpack.c.bf16 %v1464, %v1463
      %v1489 = vpack.c.bf16 %v1466, %v1465
      %v1490 = vpack.c.bf16 %v1468, %v1467
      %v1491 = vpack.c.bf16 %v1470, %v1469
      %v1492 = vpack.c.bf16 %v1472, %v1471
      %v1493 = vpack.c.bf16 %v1474, %v1473
      %v1494 = vpack.c.bf16 %v1476, %v1475
      %v1495 = vpack.c.bf16 %v1478, %v1477
      %v1496 = vpack.c.bf16 %v1480, %v1479
      %v1497 = vld [vmem:[%s7] sm:$0xf]
      %v1498 = vld [vmem:[%s7 + $0x4] sm:$0xf]
      %v1499 = vld [vmem:[%s7 + $0x8] sm:$0xf]
      %v1500 = vld [vmem:[%s7 + $0xc] sm:$0xf]
      %v1501 = vld [vmem:[%s7 + $0x10] sm:$0xf]
      %v1502 = vld [vmem:[%s7 + $0x14] sm:$0xf]
      %v1503 = vld [vmem:[%s7 + $0x18] sm:$0xf]
      %v1504 = vld [vmem:[%s7 + $0x1c] sm:$0xf]
      %v1505 = vld [vmem:[%s7 + $0x20] sm:$0xf]
      %v1506 = vld [vmem:[%s7 + $0x24] sm:$0xf]
      %v1507 = vld [vmem:[%s7 + $0x28] sm:$0xf]
      %v1508 = vld [vmem:[%s7 + $0x2c] sm:$0xf]
      %v1509 = vld [vmem:[%s7 + $0x30] sm:$0xf]
      %v1510 = vld [vmem:[%s7 + $0x34] sm:$0xf]
      %v1511 = vld [vmem:[%s7 + $0x38] sm:$0xf]
      %v1512 = vld [vmem:[%s7 + $0x3c] sm:$0xf]
      %v1513 = vld [vmem:[%s8] sm:$0x1]
      %v1515 = vlaneseq
      %v1516 = vshrl.u32 %v1515, 7
      %v1517 = vsub.s32 0, %v1516
      %v1518 = vrot.slane %v1513, %v1517
      %v1536 = vunpack.c.l.b16 %v1497
      %v1537 = vunpack.c.l.b16 %v1498
      %v1538 = vunpack.c.l.b16 %v1499
      %v1539 = vunpack.c.l.b16 %v1500
      %v1540 = vunpack.c.l.b16 %v1501
      %v1541 = vunpack.c.l.b16 %v1502
      %v1542 = vunpack.c.l.b16 %v1503
      %v1543 = vunpack.c.l.b16 %v1504
      %v1544 = vunpack.c.l.b16 %v1505
      %v1545 = vunpack.c.l.b16 %v1506
      %v1546 = vunpack.c.l.b16 %v1507
      %v1547 = vunpack.c.l.b16 %v1508
      %v1548 = vunpack.c.l.b16 %v1509
      %v1549 = vunpack.c.l.b16 %v1510
      %v1550 = vunpack.c.l.b16 %v1511
      %v1551 = vunpack.c.l.b16 %v1512
      %v1552 = vpack.c.b16 %v1537, %v1536
      %v1553 = vpack.c.b16 %v1539, %v1538
      %v1554 = vpack.c.b16 %v1541, %v1540
      %v1555 = vpack.c.b16 %v1543, %v1542
      %v1556 = vpack.c.b16 %v1545, %v1544
      %v1557 = vpack.c.b16 %v1547, %v1546
      %v1558 = vpack.c.b16 %v1549, %v1548
      %v1559 = vpack.c.b16 %v1551, %v1550
      %1568 = vmatprep.subr.bf16.mxu0 0
      %1569 = vmatpush1.bf16.msra.mxu0 %v1559
      %1570 = vmatprep.subr.bf16.mxu0 0
      %1571 = vmatpush1.bf16.msra.mxu0 %v1558
      %1572 = vmatprep.subr.bf16.mxu0 0
      %1573 = vmatpush1.bf16.msra.mxu0 %v1557
      %1574 = vmatprep.subr.bf16.mxu0 0
      %1575 = vmatpush1.bf16.msra.mxu0 %v1556
      %1576 = vmatprep.subr.bf16.mxu0 0
      %1577 = vmatpush1.bf16.msra.mxu0 %v1555
      %1578 = vmatprep.subr.bf16.mxu0 0
      %1579 = vmatpush1.bf16.msra.mxu0 %v1554
      %1580 = vmatprep.subr.bf16.mxu0 0
      %1581 = vmatpush1.bf16.msra.mxu0 %v1553
      %1582 = vmatprep.subr.bf16.mxu0 0
      %1583 = vmatpush1.bf16.msra.mxu0 %v1552
      %1584 = vmatprep.subr.bf16.mxu0 0
      %1585 = vmatpush2.bf16.msra.mxu0 0
      %1586 = vmatprep.subr.bf16.mxu0 0
      %1587 = vmatpush2.bf16.msra.mxu0 0
      %1588 = vmatprep.subr.bf16.mxu0 0
      %1589 = vmatpush2.bf16.msra.mxu0 0
      %1590 = vmatprep.subr.bf16.mxu0 0
      %1591 = vmatpush2.bf16.msra.mxu0 0
      %1592 = vmatprep.subr.bf16.mxu0 0
      %1593 = vmatpush2.bf16.msra.mxu0 0
      %1594 = vmatprep.subr.bf16.mxu0 0
      %1595 = vmatpush2.bf16.msra.mxu0 0
      %1596 = vmatprep.subr.bf16.mxu0 0
      %1597 = vmatpush2.bf16.msra.mxu0 0
      %1598 = vmatprep.subr.bf16.mxu0 0
      %1599 = vmatpush2.bf16.msra.mxu0 0
      %1600 = vmatprep.mubr.bf16.mxu0 0
      %1601 = vmatmul.mubr.bf16.gmra.mxu0 %v1481
      %v1602 = vpop.f32.mrf.mxu0
      %v1603 = vadd.f32 %v1518, %v1602
      %v1604 = vpop.f32.mrf.mxu0
      %v1605 = vpop.f32.mrf.mxu0
      %v1606 = vadd.f32 %v1518, %v1605
      %v1607 = vpop.f32.mrf.mxu0
      %1608 = vmatprep.mubr.bf16.mxu0 0
      %1609 = vmatmul.mubr.bf16.gmra.mxu0 %v1482
      %v1610 = vpop.f32.mrf.mxu0
      %v1611 = vadd.f32 %v1518, %v1610
      %v1612 = vpop.f32.mrf.mxu0
      %v1613 = vpop.f32.mrf.mxu0
      %v1614 = vadd.f32 %v1518, %v1613
      %v1615 = vpop.f32.mrf.mxu0
      %1616 = vmatprep.mubr.bf16.mxu0 0
      %1617 = vmatmul.mubr.bf16.gmra.mxu0 %v1483
      %v1618 = vpop.f32.mrf.mxu0
      %v1619 = vadd.f32 %v1518, %v1618
      %v1620 = vpop.f32.mrf.mxu0
      %v1621 = vpop.f32.mrf.mxu0
      %v1622 = vadd.f32 %v1518, %v1621
      %v1623 = vpop.f32.mrf.mxu0
      %1624 = vmatprep.mubr.bf16.mxu0 0
      %1625 = vmatmul.mubr.bf16.gmra.mxu0 %v1484
      %v1626 = vpop.f32.mrf.mxu0
      %v1627 = vadd.f32 %v1518, %v1626
      %v1628 = vpop.f32.mrf.mxu0
      %v1629 = vpop.f32.mrf.mxu0
      %v1630 = vadd.f32 %v1518, %v1629
      %v1631 = vpop.f32.mrf.mxu0
      %1632 = vmatprep.mubr.bf16.mxu0 0
      %1633 = vmatmul.mubr.bf16.gmra.mxu0 %v1485
      %v1634 = vpop.f32.mrf.mxu0
      %v1635 = vadd.f32 %v1518, %v1634
      %v1636 = vpop.f32.mrf.mxu0
      %v1637 = vpop.f32.mrf.mxu0
      %v1638 = vadd.f32 %v1518, %v1637
      %v1639 = vpop.f32.mrf.mxu0
      %1640 = vmatprep.mubr.bf16.mxu0 0
      %1641 = vmatmul.mubr.bf16.gmra.mxu0 %v1486
      %v1642 = vpop.f32.mrf.mxu0
      %v1643 = vadd.f32 %v1518, %v1642
      %v1644 = vpop.f32.mrf.mxu0
      %v1645 = vpop.f32.mrf.mxu0
      %v1646 = vadd.f32 %v1518, %v1645
      %v1647 = vpop.f32.mrf.mxu0
      %1648 = vmatprep.mubr.bf16.mxu0 0
      %1649 = vmatmul.mubr.bf16.gmra.mxu0 %v1487
      %v1650 = vpop.f32.mrf.mxu0
      %v1651 = vadd.f32 %v1518, %v1650
      %v1652 = vpop.f32.mrf.mxu0
      %v1653 = vpop.f32.mrf.mxu0
      %v1654 = vadd.f32 %v1518, %v1653
      %v1655 = vpop.f32.mrf.mxu0
      %1656 = vmatprep.mubr.bf16.mxu0 0
      %1657 = vmatmul.mubr.bf16.gmra.mxu0 %v1488
      %v1658 = vpop.f32.mrf.mxu0
      %v1659 = vadd.f32 %v1518, %v1658
      %v1660 = vpop.f32.mrf.mxu0
      %v1661 = vpop.f32.mrf.mxu0
      %v1662 = vadd.f32 %v1518, %v1661
      %v1663 = vpop.f32.mrf.mxu0
      %1664 = vmatprep.mubr.bf16.mxu0 0
      %1665 = vmatmul.mubr.bf16.gmra.mxu0 %v1489
      %v1666 = vpop.f32.mrf.mxu0
      %v1667 = vadd.f32 %v1518, %v1666
      %v1668 = vpop.f32.mrf.mxu0
      %v1669 = vpop.f32.mrf.mxu0
      %v1670 = vadd.f32 %v1518, %v1669
      %v1671 = vpop.f32.mrf.mxu0
      %1672 = vmatprep.mubr.bf16.mxu0 0
      %1673 = vmatmul.mubr.bf16.gmra.mxu0 %v1490
      %v1674 = vpop.f32.mrf.mxu0
      %v1675 = vadd.f32 %v1518, %v1674
      %v1676 = vpop.f32.mrf.mxu0
      %v1677 = vpop.f32.mrf.mxu0
      %v1678 = vadd.f32 %v1518, %v1677
      %v1679 = vpop.f32.mrf.mxu0
      %1680 = vmatprep.mubr.bf16.mxu0 0
      %1681 = vmatmul.mubr.bf16.gmra.mxu0 %v1491
      %v1682 = vpop.f32.mrf.mxu0
      %v1683 = vadd.f32 %v1518, %v1682
      %v1684 = vpop.f32.mrf.mxu0
      %v1685 = vpop.f32.mrf.mxu0
      %v1686 = vadd.f32 %v1518, %v1685
      %v1687 = vpop.f32.mrf.mxu0
      %1688 = vmatprep.mubr.bf16.mxu0 0
      %1689 = vmatmul.mubr.bf16.gmra.mxu0 %v1492
      %v1690 = vpop.f32.mrf.mxu0
      %v1691 = vadd.f32 %v1518, %v1690
      %v1692 = vpop.f32.mrf.mxu0
      %v1693 = vpop.f32.mrf.mxu0
      %v1694 = vadd.f32 %v1518, %v1693
      %v1695 = vpop.f32.mrf.mxu0
      %1696 = vmatprep.mubr.bf16.mxu0 0
      %1697 = vmatmul.mubr.bf16.gmra.mxu0 %v1493
      %v1698 = vpop.f32.mrf.mxu0
      %v1699 = vadd.f32 %v1518, %v1698
      %v1700 = vpop.f32.mrf.mxu0
      %v1701 = vpop.f32.mrf.mxu0
      %v1702 = vadd.f32 %v1518, %v1701
      %v1703 = vpop.f32.mrf.mxu0
      %1704 = vmatprep.mubr.bf16.mxu0 0
      %1705 = vmatmul.mubr.bf16.gmra.mxu0 %v1494
      %v1706 = vpop.f32.mrf.mxu0
      %v1707 = vadd.f32 %v1518, %v1706
      %v1708 = vpop.f32.mrf.mxu0
      %v1709 = vpop.f32.mrf.mxu0
      %v1710 = vadd.f32 %v1518, %v1709
      %v1711 = vpop.f32.mrf.mxu0
      %1712 = vmatprep.mubr.bf16.mxu0 0
      %1713 = vmatmul.mubr.bf16.gmra.mxu0 %v1495
      %v1714 = vpop.f32.mrf.mxu0
      %v1715 = vadd.f32 %v1518, %v1714
      %v1716 = vpop.f32.mrf.mxu0
      %v1717 = vpop.f32.mrf.mxu0
      %v1718 = vadd.f32 %v1518, %v1717
      %v1719 = vpop.f32.mrf.mxu0
      %1720 = vmatprep.mubr.bf16.mxu0 0
      %1721 = vmatmul.mubr.bf16.gmra.mxu0 %v1496
      %v1722 = vpop.f32.mrf.mxu0
      %v1723 = vadd.f32 %v1518, %v1722
      %v1724 = vpop.f32.mrf.mxu0
      %v1725 = vpop.f32.mrf.mxu0
      %v1726 = vadd.f32 %v1518, %v1725
      %v1727 = vpop.f32.mrf.mxu0
      %1728 = vdwg.mxu0
      %v1729 = vpack.c.bf16 %v1606, %v1603
      %v1730 = vpack.c.bf16 %v1614, %v1611
      %v1731 = vpack.c.bf16 %v1622, %v1619
      %v1732 = vpack.c.bf16 %v1630, %v1627
      %v1733 = vpack.c.bf16 %v1638, %v1635
      %v1734 = vpack.c.bf16 %v1646, %v1643
      %v1735 = vpack.c.bf16 %v1654, %v1651
      %v1736 = vpack.c.bf16 %v1662, %v1659
      %v1737 = vpack.c.bf16 %v1670, %v1667
      %v1738 = vpack.c.bf16 %v1678, %v1675
      %v1739 = vpack.c.bf16 %v1686, %v1683
      %v1740 = vpack.c.bf16 %v1694, %v1691
      %v1741 = vpack.c.bf16 %v1702, %v1699
      %v1742 = vpack.c.bf16 %v1710, %v1707
      %v1743 = vpack.c.bf16 %v1718, %v1715
      %v1744 = vpack.c.bf16 %v1726, %v1723
      %v1761 = vunpack.c.l.b16 %v1729
      %v1762 = vunpack.c.h.b16 %v1729
      %v1763 = vunpack.c.l.b16 %v1730
      %v1764 = vunpack.c.h.b16 %v1730
      %v1765 = vunpack.c.l.b16 %v1731
      %v1766 = vunpack.c.h.b16 %v1731
      %v1767 = vunpack.c.l.b16 %v1732
      %v1768 = vunpack.c.h.b16 %v1732
      %v1769 = vunpack.c.l.b16 %v1733
      %v1770 = vunpack.c.h.b16 %v1733
      %v1771 = vunpack.c.l.b16 %v1734
      %v1772 = vunpack.c.h.b16 %v1734
      %v1773 = vunpack.c.l.b16 %v1735
      %v1774 = vunpack.c.h.b16 %v1735
      %v1775 = vunpack.c.l.b16 %v1736
      %v1776 = vunpack.c.h.b16 %v1736
      %v1777 = vunpack.c.l.b16 %v1737
      %v1778 = vunpack.c.h.b16 %v1737
      %v1779 = vunpack.c.l.b16 %v1738
      %v1780 = vunpack.c.h.b16 %v1738
      %v1781 = vunpack.c.l.b16 %v1739
      %v1782 = vunpack.c.h.b16 %v1739
      %v1783 = vunpack.c.l.b16 %v1740
      %v1784 = vunpack.c.h.b16 %v1740
      %v1785 = vunpack.c.l.b16 %v1741
      %v1786 = vunpack.c.h.b16 %v1741
      %v1787 = vunpack.c.l.b16 %v1742
      %v1788 = vunpack.c.h.b16 %v1742
      %v1789 = vunpack.c.l.b16 %v1743
      %v1790 = vunpack.c.h.b16 %v1743
      %v1791 = vunpack.c.l.b16 %v1744
      %v1792 = vunpack.c.h.b16 %v1744
      %v1793 = vpack.c.b16 %v1761, %v1761
      %v1794 = vpack.c.b16 %v1762, %v1762
      %v1795 = vpack.c.b16 %v1763, %v1763
      %v1796 = vpack.c.b16 %v1764, %v1764
      %v1797 = vpack.c.b16 %v1765, %v1765
      %v1798 = vpack.c.b16 %v1766, %v1766
      %v1799 = vpack.c.b16 %v1767, %v1767
      %v1800 = vpack.c.b16 %v1768, %v1768
      %v1801 = vpack.c.b16 %v1769, %v1769
      %v1802 = vpack.c.b16 %v1770, %v1770
      %v1803 = vpack.c.b16 %v1771, %v1771
      %v1804 = vpack.c.b16 %v1772, %v1772
      %v1805 = vpack.c.b16 %v1773, %v1773
      %v1806 = vpack.c.b16 %v1774, %v1774
      %v1807 = vpack.c.b16 %v1775, %v1775
      %v1808 = vpack.c.b16 %v1776, %v1776
      %v1809 = vpack.c.b16 %v1777, %v1777
      %v1810 = vpack.c.b16 %v1778, %v1778
      %v1811 = vpack.c.b16 %v1779, %v1779
      %v1812 = vpack.c.b16 %v1780, %v1780
      %v1813 = vpack.c.b16 %v1781, %v1781
      %v1814 = vpack.c.b16 %v1782, %v1782
      %v1815 = vpack.c.b16 %v1783, %v1783
      %v1816 = vpack.c.b16 %v1784, %v1784
      %v1817 = vpack.c.b16 %v1785, %v1785
      %v1818 = vpack.c.b16 %v1786, %v1786
      %v1819 = vpack.c.b16 %v1787, %v1787
      %v1820 = vpack.c.b16 %v1788, %v1788
      %v1821 = vpack.c.b16 %v1789, %v1789
      %v1822 = vpack.c.b16 %v1790, %v1790
      %v1823 = vpack.c.b16 %v1791, %v1791
      %v1824 = vpack.c.b16 %v1792, %v1792
      %1857 = vst [vmem:[%s334] sm:$0xf] %v1793
      %1858 = vst [vmem:[%s334 + $0x4] sm:$0xf] %v1794
      %1859 = vst [vmem:[%s334 + $0x8] sm:$0xf] %v1795
      %1860 = vst [vmem:[%s334 + $0xc] sm:$0xf] %v1796
      %1861 = vst [vmem:[%s334 + $0x10] sm:$0xf] %v1797
      %1862 = vst [vmem:[%s334 + $0x14] sm:$0xf] %v1798
      %1863 = vst [vmem:[%s334 + $0x18] sm:$0xf] %v1799
      %1864 = vst [vmem:[%s334 + $0x1c] sm:$0xf] %v1800
      %1865 = vst [vmem:[%s334 + $0x20] sm:$0xf] %v1801
      %1866 = vst [vmem:[%s334 + $0x24] sm:$0xf] %v1802
      %1867 = vst [vmem:[%s334 + $0x28] sm:$0xf] %v1803
      %1868 = vst [vmem:[%s334 + $0x2c] sm:$0xf] %v1804
      %1869 = vst [vmem:[%s334 + $0x30] sm:$0xf] %v1805
      %1870 = vst [vmem:[%s334 + $0x34] sm:$0xf] %v1806
      %1871 = vst [vmem:[%s334 + $0x38] sm:$0xf] %v1807
      %1872 = vst [vmem:[%s334 + $0x3c] sm:$0xf] %v1808
      %1873 = vst [vmem:[%s334 + $0x40] sm:$0xf] %v1809
      %1874 = vst [vmem:[%s334 + $0x44] sm:$0xf] %v1810
      %1875 = vst [vmem:[%s334 + $0x48] sm:$0xf] %v1811
      %1876 = vst [vmem:[%s334 + $0x4c] sm:$0xf] %v1812
      %1877 = vst [vmem:[%s334 + $0x50] sm:$0xf] %v1813
      %1878 = vst [vmem:[%s334 + $0x54] sm:$0xf] %v1814
      %1879 = vst [vmem:[%s334 + $0x58] sm:$0xf] %v1815
      %1880 = vst [vmem:[%s334 + $0x5c] sm:$0xf] %v1816
      %1881 = vst [vmem:[%s334 + $0x60] sm:$0xf] %v1817
      %1882 = vst [vmem:[%s334 + $0x64] sm:$0xf] %v1818
      %1883 = vst [vmem:[%s334 + $0x68] sm:$0xf] %v1819
      %1884 = vst [vmem:[%s334 + $0x6c] sm:$0xf] %v1820
      %1885 = vst [vmem:[%s334 + $0x70] sm:$0xf] %v1821
      %1886 = vst [vmem:[%s334 + $0x74] sm:$0xf] %v1822
      %1887 = vst [vmem:[%s334 + $0x78] sm:$0xf] %v1823
      %1888 = vst [vmem:[%s334 + $0x7c] sm:$0xf] %v1824
      %s1889 = smul.u32 32, %s20
      %p1890 = scmp.lt.s32.totalorder %s1889, 63
      %s1891 = scalar_select %p1890, %s1889, 63
      %s1892 = smul.addr %s1891, 4
      %s1893 = scalar_lea.vmem %s9, %s1892
      // Predicated region
      $region57: #{_convnet_forward_jit.1} parent=55 // pred_check
        %p1894 = pneg %p232
      $region58: #{_convnet_forward_jit.1} parent=55 // pred_check_branch
        %1896 = sbr.rel (%p1894) target = $region60
      $region59: #{_convnet_forward_jit.1} parent=55 // pred_region
        %s1897 = smul.u32 32, %s20
      $region60: #{_convnet_forward_jit.1} parent=55 // pred_fallthru
        _
    $region56: #{_convnet_forward_jit.1} parent=5 // pred_fallthru
      _
    %p1898 = scmp.le.s32.totalorder 2, %s15
    // Predicated region
    $region61: #{_convnet_forward_jit.1} parent=5 // pred_check
      %p1899 = pneg %p1898
    $region62: #{_convnet_forward_jit.1} parent=5 // pred_check_branch
      %1901 = sbr.rel (%p1899) target = $region64
    $region63: #{_convnet_forward_jit.1} parent=5 // pred_region
      %s1902 = ssub.s32 %s15, 2
      // Predicated region
      $region65: #{_convnet_forward_jit.1} parent=63 // pred_check
        %p1903 = pneg %p238
      $region66: #{_convnet_forward_jit.1} parent=63 // pred_check_branch
        %1905 = sbr.rel (%p1903) target = $region68
      $region67: #{_convnet_forward_jit.1} parent=63 // pred_region
        %s1906 = smul.u32 32, %s21
        %p1907 = scmp.lt.s32.totalorder %s1906, 63
        %s1908 = scalar_select %p1907, %s1906, 63
        %s1909 = smul.addr %s1908, 4
        %s1910 = scalar_lea.vmem %s9, %s1909
      $region68: #{_convnet_forward_jit.1} parent=63 // pred_fallthru
        _
    $region64: #{_convnet_forward_jit.1} parent=5 // pred_fallthru
      _
  $region6: #{_convnet_forward_jit.1} parent=0 // loop_footer
    %s19 = sadd.s32 1, %s15
  $region7: #{_convnet_forward_jit.1} parent=0 // loop_footer_branch
    %14 = sbr.rel target = $region3
  $region8: #{_convnet_forward_jit.1} parent=0 // loop_exit
    _

</llo_original>
